<compile_context>
chip_gen: v7x
topology: tpu7x:2x2x1
jax: 0.10.0
libtpu: 0.0.40
codegen_flags: <defaults>
</compile_context>

<pallas_src>
import math

import jax
import jax.numpy as jnp
from jax.experimental import pallas as pl
from jax.experimental.pallas import tpu as pltpu  # noqa: F401  (TPU backend)

SEQ, BATCH, EMBED, HEADS, FFN = 8, 2, 32, 4, 64
HEAD_DIM = EMBED // HEADS
LN_EPS = 1e-5


# ---------------------------------------------------------------------------
# Single fused encoder-layer kernel (grid-less: one invocation, all in VMEM)
# ---------------------------------------------------------------------------
def _layer_norm(y, g, b):
    mu = jnp.mean(y, axis=-1, keepdims=True)
    var = jnp.mean(jnp.square(y - mu), axis=-1, keepdims=True)
    return (y - mu) * jax.lax.rsqrt(var + LN_EPS) * g + b


def _encoder_layer_kernel(x_ref, bias_ref,
                          wqkv_ref, bqkv_ref, wout_ref, bout_ref,
                          wfc1_ref, bfc1_ref, wfc2_ref, bfc2_ref,
                          ln0g_ref, ln0b_ref, ln1g_ref, ln1b_ref,
                          o_ref):
    f32 = jnp.float32
    BT = BATCH * SEQ

    x = x_ref[...].astype(f32)          # (BT, E), batch-major rows (b*T + t)
    bias = bias_ref[...]                # (BT, BT) additive mask: 0 valid / -1e30 masked

    # ---- fused QKV projection: one (BT, E) x (E, 3E) MXU pass ------------------
    # (q-scale is already folded into the Q columns of wqkv / bqkv)
    qkv = jnp.dot(x, wqkv_ref[...], preferred_element_type=f32) + bqkv_ref[...]
    q = qkv[:, :EMBED]
    k = qkv[:, EMBED:2 * EMBED]
    v = qkv[:, 2 * EMBED:]

    wout = wout_ref[...]                # (E, E), rows h*Dh:(h+1)*Dh belong to head h

    # ---- attention: per head, all (batch, query) rows in one dot ---------------
    # cross-batch attention and key padding are removed by the additive bias, so
    # every head needs only two tiny MXU dots for the whole batch (no grid steps).
    # TODO(synk): fairseq uses -inf for padded keys (NaN on fully-masked rows);
    #             -1e30 is used here so fully-masked rows stay finite.
    attn_acc = jnp.zeros((BT, EMBED), f32)
    for h in range(HEADS):              # unrolled (HEADS=4)
        sl = slice(h * HEAD_DIM, (h + 1) * HEAD_DIM)
        qh, kh, vh = q[:, sl], k[:, sl], v[:, sl]                      # (BT, Dh)
        s = jax.lax.dot_general(qh, kh, (((1,), (1,)), ((), ())),
                                preferred_element_type=f32) + bias     # (BT, BT)
        m = jnp.max(s, axis=-1, keepdims=True)
        p = jnp.exp(s - m)
        denom = jnp.sum(p, axis=-1, keepdims=True)
        probs = p * pl.reciprocal(denom)                               # exact 1/x
        ah = jnp.dot(probs, vh, preferred_element_type=f32)            # (BT, Dh)
        # fold the per-head output directly into the output projection
        attn_acc = attn_acc + jnp.dot(ah, wout[sl, :],
                                      preferred_element_type=f32)      # (BT, E)
    attn_out = attn_acc + bout_ref[...]

    # ---- dropout (no-op) + residual + LayerNorm 0 (post-norm) ------------------
    y = _layer_norm(x + attn_out, ln0g_ref[...], ln0b_ref[...])

    # ---- FFN: relu(fc1) -> fc2, residual + LayerNorm 1 -------------------------
    h1 = jnp.maximum(
        jnp.dot(y, wfc1_ref[...], preferred_element_type=f32) + bfc1_ref[...], 0.0)
    h2 = jnp.dot(h1, wfc2_ref[...], preferred_element_type=f32) + bfc2_ref[...]
    z = _layer_norm(y + h2, ln1g_ref[...], ln1b_ref[...])

    o_ref[...] = z.astype(o_ref.dtype)  # single lane-dense-as-possible (BT, E) store


# ---------------------------------------------------------------------------
# Wrapper: one pallas_call for the whole layer
# ---------------------------------------------------------------------------
def encoder_layer_forward(x, encoder_padding_mask, kparams):
    """x: (T, B, E); encoder_padding_mask: (B, T) bool (True = padded)."""
    T, B, E = x.shape
    xb = x.transpose(1, 0, 2).reshape(B * T, E)          # batch-major rows

    # additive bias (BT, BT): valid iff same batch and key not padded
    row_b = jnp.arange(B * T, dtype=jnp.int32) // T
    same_batch = row_b[:, None] == row_b[None, :]
    key_ok = jnp.logical_not(encoder_padding_mask.reshape(B * T))
    bias = jnp.where(same_batch & key_ok[None, :], 0.0, -1e30).astype(jnp.float32)

    out = pl.pallas_call(
        _encoder_layer_kernel,
        out_shape=jax.ShapeDtypeStruct((B * T, E), x.dtype),
    )(xb, bias,
      kparams["wqkv_t"], kparams["bqkv"],
      kparams["wout_t"], kparams["bout"],
      kparams["wfc1_t"], kparams["bfc1"],
      kparams["wfc2_t"], kparams["bfc2"],
      kparams["ln0_g"], kparams["ln0_b"],
      kparams["ln1_g"], kparams["ln1_b"])

    return out.reshape(B, T, E).transpose(1, 0, 2)       # back to (T, B, E)


# ---------------------------------------------------------------------------
# Parameter preprocessing (outside jit): transpose weights, fold q-scale
# ---------------------------------------------------------------------------
def prepare_params(p):
    scale = HEAD_DIM ** -0.5
    wqkv_t = p["in_proj_w"].T                             # (E, 3E)
    wqkv_t = wqkv_t.at[:, :EMBED].multiply(scale)         # fold 1/sqrt(Dh) into Q
    bqkv = p["in_proj_b"].at[:EMBED].multiply(scale).reshape(1, 3 * EMBED)
    return {
        "wqkv_t": wqkv_t,
        "bqkv": bqkv,
        "wout_t": p["out_proj_w"].T,
        "bout": p["out_proj_b"].reshape(1, EMBED),
        "wfc1_t": p["fc1_w"].T,
        "bfc1": p["fc1_b"].reshape(1, FFN),
        "wfc2_t": p["fc2_w"].T,
        "bfc2": p["fc2_b"].reshape(1, EMBED),
        "ln0_g": p["ln0_g"].reshape(1, EMBED),
        "ln0_b": p["ln0_b"].reshape(1, EMBED),
        "ln1_g": p["ln1_g"].reshape(1, EMBED),
        "ln1_b": p["ln1_b"].reshape(1, EMBED),
    }


# ---------------------------------------------------------------------------
# Pure-JAX reference (fairseq semantics) for verification
# ---------------------------------------------------------------------------
def reference_forward(x, pad_mask, params):
    T, B, E = x.shape
    H, Dh = HEADS, HEAD_DIM

    def lin(t, w, b):
        return t @ w.T + b

    def ln(t, g, b):
        mu = t.mean(-1, keepdims=True)
        var = ((t - mu) ** 2).mean(-1, keepdims=True)
        return (t - mu) / jnp.sqrt(var + LN_EPS) * g + b

    x2 = x.reshape(T * B, E)
    qkv = lin(x2, params["in_proj_w"], params["in_proj_b"])
    q, k, v = jnp.split(qkv, 3, axis=-1)
    q = q * (Dh ** -0.5)
    q = q.reshape(T, B * H, Dh).transpose(1, 0, 2)
    k = k.reshape(T, B * H, Dh).transpose(1, 0, 2)
    v = v.reshape(T, B * H, Dh).transpose(1, 0, 2)
    s = jnp.einsum("bqd,bkd->bqk", q, k).reshape(B, H, T, T)
    s = jnp.where(pad_mask[:, None, None, :], -jnp.inf, s)
    p = jax.nn.softmax(s, axis=-1).reshape(B * H, T, T)
    a = jnp.einsum("bqk,bkd->bqd", p, v)
    a = a.transpose(1, 0, 2).reshape(T * B, E)
    attn = lin(a, params["out_proj_w"], params["out_proj_b"])
    x1 = ln(x2 + attn, params["ln0_g"], params["ln0_b"])
    h = jax.nn.relu(lin(x1, params["fc1_w"], params["fc1_b"]))
    h = lin(h, params["fc2_w"], params["fc2_b"])
    out = ln(x1 + h, params["ln1_g"], params["ln1_b"])
    return out.reshape(T, B, E)


# ---------------------------------------------------------------------------
# Deterministic parameter init (xavier_uniform weights, zero biases, LN=1/0)
# ---------------------------------------------------------------------------
def xavier_uniform(key, out_f, in_f):
    limit = math.sqrt(6.0 / (in_f + out_f))
    return jax.random.uniform(key, (out_f, in_f), jnp.float32, -limit, limit)


def make_params(key):
    ks = jax.random.split(key, 4)
    return {
        "in_proj_w": xavier_uniform(ks[0], 3 * EMBED, EMBED),
        "in_proj_b": jnp.zeros((3 * EMBED,), jnp.float32),
        "out_proj_w": xavier_uniform(ks[1], EMBED, EMBED),
        "out_proj_b": jnp.zeros((EMBED,), jnp.float32),
        "fc1_w": xavier_uniform(ks[2], FFN, EMBED),
        "fc1_b": jnp.zeros((FFN,), jnp.float32),
        "fc2_w": xavier_uniform(ks[3], EMBED, FFN),
        "fc2_b": jnp.zeros((EMBED,), jnp.float32),
        "ln0_g": jnp.ones((EMBED,), jnp.float32),
        "ln0_b": jnp.zeros((EMBED,), jnp.float32),
        "ln1_g": jnp.ones((EMBED,), jnp.float32),
        "ln1_b": jnp.zeros((EMBED,), jnp.float32),
    }


if __name__ == "__main__":
    key = jax.random.PRNGKey(0)
    k_param, k_x = jax.random.split(key)
    params = make_params(k_param)
    kparams = prepare_params(params)          # pre-transposed / pre-folded, outside jit

    x = jax.random.normal(k_x, (SEQ, BATCH, EMBED), jnp.float32)  # (seq, batch, embed)
    # padding mask (batch, src_len): batch 1 has its last 2 positions padded
    pad_mask = jnp.zeros((BATCH, SEQ), jnp.bool_).at[1, -2:].set(True)

    out = jax.jit(encoder_layer_forward)(x, pad_mask, kparams)
    out = jax.block_until_ready(out)

    ref = reference_forward(x, pad_mask, params)
    assert out.shape == (SEQ, BATCH, EMBED)
    err = float(jnp.abs(out - ref).max())
    assert jnp.allclose(out, ref, atol=1e-4, rtol=1e-4), err

    print("KERNEL_OK")
</pallas_src>

<mosaic_0001>
module attributes {stable_mosaic.version = 11 : i64} {
  func.func @_encoder_layer_kernel(%arg0: memref<16x32xf32, #tpu.memory_space<vmem>>, %arg1: memref<16x16xf32, #tpu.memory_space<vmem>>, %arg2: memref<32x96xf32, #tpu.memory_space<vmem>>, %arg3: memref<1x96xf32, #tpu.memory_space<vmem>>, %arg4: memref<32x32xf32, #tpu.memory_space<vmem>>, %arg5: memref<1x32xf32, #tpu.memory_space<vmem>>, %arg6: memref<32x64xf32, #tpu.memory_space<vmem>>, %arg7: memref<1x64xf32, #tpu.memory_space<vmem>>, %arg8: memref<64x32xf32, #tpu.memory_space<vmem>>, %arg9: memref<1x32xf32, #tpu.memory_space<vmem>>, %arg10: memref<1x32xf32, #tpu.memory_space<vmem>>, %arg11: memref<1x32xf32, #tpu.memory_space<vmem>>, %arg12: memref<1x32xf32, #tpu.memory_space<vmem>>, %arg13: memref<1x32xf32, #tpu.memory_space<vmem>>, %arg14: memref<16x32xf32, #tpu.memory_space<vmem>>) attributes {dimension_semantics = [], scalar_prefetch = 0 : i64, scratch_operands = 0 : i64, tpu.core_type = #tpu.core_type<tc>} {
    %c0 = arith.constant 0 : index
    %c0_0 = arith.constant 0 : index
    %0 = vector.load %arg0[%c0, %c0_0] : memref<16x32xf32, #tpu.memory_space<vmem>>, vector<16x32xf32>
    %c0_1 = arith.constant 0 : index
    %c0_2 = arith.constant 0 : index
    %1 = vector.load %arg1[%c0_1, %c0_2] : memref<16x16xf32, #tpu.memory_space<vmem>>, vector<16x16xf32>
    %c0_3 = arith.constant 0 : index
    %c0_4 = arith.constant 0 : index
    %2 = vector.load %arg2[%c0_3, %c0_4] : memref<32x96xf32, #tpu.memory_space<vmem>>, vector<32x96xf32>
    %cst = arith.constant dense<0.000000e+00> : vector<16x96xf32>
    %3 = tpu.matmul %0, %2, %cst {dimension_numbers = #tpu.dot_dimension_numbers<[1], [0], [0], [1], [0, 0, 1, 1], [], []>} : vector<16x32xf32>, vector<32x96xf32>, vector<16x96xf32> -> vector<16x96xf32>
    %c0_5 = arith.constant 0 : index
    %c0_6 = arith.constant 0 : index
    %4 = vector.load %arg3[%c0_5, %c0_6] : memref<1x96xf32, #tpu.memory_space<vmem>>, vector<1x96xf32>
    %5 = vector.broadcast %4 : vector<1x96xf32> to vector<16x96xf32>
    %6 = arith.addf %3, %5 : vector<16x96xf32>
    %7 = vector.extract_strided_slice %6 {offsets = [0, 0], sizes = [16, 32], strides = [1, 1]} : vector<16x96xf32> to vector<16x32xf32>
    %8 = vector.extract_strided_slice %6 {offsets = [0, 32], sizes = [16, 32], strides = [1, 1]} : vector<16x96xf32> to vector<16x32xf32>
    %9 = vector.extract_strided_slice %6 {offsets = [0, 64], sizes = [16, 32], strides = [1, 1]} : vector<16x96xf32> to vector<16x32xf32>
    %c0_7 = arith.constant 0 : index
    %c0_8 = arith.constant 0 : index
    %10 = vector.load %arg4[%c0_7, %c0_8] : memref<32x32xf32, #tpu.memory_space<vmem>>, vector<32x32xf32>
    %cst_9 = arith.constant 0.000000e+00 : f32
    %11 = vector.broadcast %cst_9 : f32 to vector<16x32xf32>
    %12 = vector.extract_strided_slice %7 {offsets = [0, 0], sizes = [16, 8], strides = [1, 1]} : vector<16x32xf32> to vector<16x8xf32>
    %13 = vector.extract_strided_slice %8 {offsets = [0, 0], sizes = [16, 8], strides = [1, 1]} : vector<16x32xf32> to vector<16x8xf32>
    %14 = vector.extract_strided_slice %9 {offsets = [0, 0], sizes = [16, 8], strides = [1, 1]} : vector<16x32xf32> to vector<16x8xf32>
    %cst_10 = arith.constant dense<0.000000e+00> : vector<16x16xf32>
    %15 = tpu.matmul %12, %13, %cst_10 {dimension_numbers = #tpu.dot_dimension_numbers<[1], [1], [0], [0], [0, 0, 1, 0], [], []>} : vector<16x8xf32>, vector<16x8xf32>, vector<16x16xf32> -> vector<16x16xf32>
    %16 = arith.addf %15, %1 : vector<16x16xf32>
    %cst_11 = arith.constant dense<0xFF800000> : vector<16xf32>
    %17 = vector.multi_reduction <maximumf>, %16, %cst_11 [1] : vector<16x16xf32> to vector<16xf32>
    %18 = vector.shape_cast %17 : vector<16xf32> to vector<16x1xf32>
    %19 = vector.broadcast %18 : vector<16x1xf32> to vector<16x16xf32>
    %20 = arith.subf %16, %19 : vector<16x16xf32>
    %21 = math.exp %20 : vector<16x16xf32>
    %cst_12 = arith.constant dense<0.000000e+00> : vector<16xf32>
    %22 = vector.multi_reduction <add>, %21, %cst_12 [1] : vector<16x16xf32> to vector<16xf32>
    %23 = vector.shape_cast %22 : vector<16xf32> to vector<16x1xf32>
    %24 = tpu.reciprocal %23 : vector<16x1xf32> -> vector<16x1xf32>
    %25 = vector.broadcast %24 : vector<16x1xf32> to vector<16x16xf32>
    %26 = arith.mulf %21, %25 : vector<16x16xf32>
    %cst_13 = arith.constant dense<0.000000e+00> : vector<16x8xf32>
    %27 = tpu.matmul %26, %14, %cst_13 {dimension_numbers = #tpu.dot_dimension_numbers<[1], [0], [0], [1], [0, 0, 1, 1], [], []>} : vector<16x16xf32>, vector<16x8xf32>, vector<16x8xf32> -> vector<16x8xf32>
    %28 = vector.extract_strided_slice %10 {offsets = [0, 0], sizes = [8, 32], strides = [1, 1]} : vector<32x32xf32> to vector<8x32xf32>
    %cst_14 = arith.constant dense<0.000000e+00> : vector<16x32xf32>
    %29 = tpu.matmul %27, %28, %cst_14 {dimension_numbers = #tpu.dot_dimension_numbers<[1], [0], [0], [1], [0, 0, 1, 1], [], []>} : vector<16x8xf32>, vector<8x32xf32>, vector<16x32xf32> -> vector<16x32xf32>
    %30 = arith.addf %11, %29 : vector<16x32xf32>
    %31 = vector.extract_strided_slice %7 {offsets = [0, 8], sizes = [16, 8], strides = [1, 1]} : vector<16x32xf32> to vector<16x8xf32>
    %32 = vector.extract_strided_slice %8 {offsets = [0, 8], sizes = [16, 8], strides = [1, 1]} : vector<16x32xf32> to vector<16x8xf32>
    %33 = vector.extract_strided_slice %9 {offsets = [0, 8], sizes = [16, 8], strides = [1, 1]} : vector<16x32xf32> to vector<16x8xf32>
    %cst_15 = arith.constant dense<0.000000e+00> : vector<16x16xf32>
    %34 = tpu.matmul %31, %32, %cst_15 {dimension_numbers = #tpu.dot_dimension_numbers<[1], [1], [0], [0], [0, 0, 1, 0], [], []>} : vector<16x8xf32>, vector<16x8xf32>, vector<16x16xf32> -> vector<16x16xf32>
    %35 = arith.addf %34, %1 : vector<16x16xf32>
    %cst_16 = arith.constant dense<0xFF800000> : vector<16xf32>
    %36 = vector.multi_reduction <maximumf>, %35, %cst_16 [1] : vector<16x16xf32> to vector<16xf32>
    %37 = vector.shape_cast %36 : vector<16xf32> to vector<16x1xf32>
    %38 = vector.broadcast %37 : vector<16x1xf32> to vector<16x16xf32>
    %39 = arith.subf %35, %38 : vector<16x16xf32>
    %40 = math.exp %39 : vector<16x16xf32>
    %cst_17 = arith.constant dense<0.000000e+00> : vector<16xf32>
    %41 = vector.multi_reduction <add>, %40, %cst_17 [1] : vector<16x16xf32> to vector<16xf32>
    %42 = vector.shape_cast %41 : vector<16xf32> to vector<16x1xf32>
    %43 = tpu.reciprocal %42 : vector<16x1xf32> -> vector<16x1xf32>
    %44 = vector.broadcast %43 : vector<16x1xf32> to vector<16x16xf32>
    %45 = arith.mulf %40, %44 : vector<16x16xf32>
    %cst_18 = arith.constant dense<0.000000e+00> : vector<16x8xf32>
    %46 = tpu.matmul %45, %33, %cst_18 {dimension_numbers = #tpu.dot_dimension_numbers<[1], [0], [0], [1], [0, 0, 1, 1], [], []>} : vector<16x16xf32>, vector<16x8xf32>, vector<16x8xf32> -> vector<16x8xf32>
    %47 = vector.extract_strided_slice %10 {offsets = [8, 0], sizes = [8, 32], strides = [1, 1]} : vector<32x32xf32> to vector<8x32xf32>
    %cst_19 = arith.constant dense<0.000000e+00> : vector<16x32xf32>
    %48 = tpu.matmul %46, %47, %cst_19 {dimension_numbers = #tpu.dot_dimension_numbers<[1], [0], [0], [1], [0, 0, 1, 1], [], []>} : vector<16x8xf32>, vector<8x32xf32>, vector<16x32xf32> -> vector<16x32xf32>
    %49 = arith.addf %30, %48 : vector<16x32xf32>
    %50 = vector.extract_strided_slice %7 {offsets = [0, 16], sizes = [16, 8], strides = [1, 1]} : vector<16x32xf32> to vector<16x8xf32>
    %51 = vector.extract_strided_slice %8 {offsets = [0, 16], sizes = [16, 8], strides = [1, 1]} : vector<16x32xf32> to vector<16x8xf32>
    %52 = vector.extract_strided_slice %9 {offsets = [0, 16], sizes = [16, 8], strides = [1, 1]} : vector<16x32xf32> to vector<16x8xf32>
    %cst_20 = arith.constant dense<0.000000e+00> : vector<16x16xf32>
    %53 = tpu.matmul %50, %51, %cst_20 {dimension_numbers = #tpu.dot_dimension_numbers<[1], [1], [0], [0], [0, 0, 1, 0], [], []>} : vector<16x8xf32>, vector<16x8xf32>, vector<16x16xf32> -> vector<16x16xf32>
    %54 = arith.addf %53, %1 : vector<16x16xf32>
    %cst_21 = arith.constant dense<0xFF800000> : vector<16xf32>
    %55 = vector.multi_reduction <maximumf>, %54, %cst_21 [1] : vector<16x16xf32> to vector<16xf32>
    %56 = vector.shape_cast %55 : vector<16xf32> to vector<16x1xf32>
    %57 = vector.broadcast %56 : vector<16x1xf32> to vector<16x16xf32>
    %58 = arith.subf %54, %57 : vector<16x16xf32>
    %59 = math.exp %58 : vector<16x16xf32>
    %cst_22 = arith.constant dense<0.000000e+00> : vector<16xf32>
    %60 = vector.multi_reduction <add>, %59, %cst_22 [1] : vector<16x16xf32> to vector<16xf32>
    %61 = vector.shape_cast %60 : vector<16xf32> to vector<16x1xf32>
    %62 = tpu.reciprocal %61 : vector<16x1xf32> -> vector<16x1xf32>
    %63 = vector.broadcast %62 : vector<16x1xf32> to vector<16x16xf32>
    %64 = arith.mulf %59, %63 : vector<16x16xf32>
    %cst_23 = arith.constant dense<0.000000e+00> : vector<16x8xf32>
    %65 = tpu.matmul %64, %52, %cst_23 {dimension_numbers = #tpu.dot_dimension_numbers<[1], [0], [0], [1], [0, 0, 1, 1], [], []>} : vector<16x16xf32>, vector<16x8xf32>, vector<16x8xf32> -> vector<16x8xf32>
    %66 = vector.extract_strided_slice %10 {offsets = [16, 0], sizes = [8, 32], strides = [1, 1]} : vector<32x32xf32> to vector<8x32xf32>
    %cst_24 = arith.constant dense<0.000000e+00> : vector<16x32xf32>
    %67 = tpu.matmul %65, %66, %cst_24 {dimension_numbers = #tpu.dot_dimension_numbers<[1], [0], [0], [1], [0, 0, 1, 1], [], []>} : vector<16x8xf32>, vector<8x32xf32>, vector<16x32xf32> -> vector<16x32xf32>
    %68 = arith.addf %49, %67 : vector<16x32xf32>
    %69 = vector.extract_strided_slice %7 {offsets = [0, 24], sizes = [16, 8], strides = [1, 1]} : vector<16x32xf32> to vector<16x8xf32>
    %70 = vector.extract_strided_slice %8 {offsets = [0, 24], sizes = [16, 8], strides = [1, 1]} : vector<16x32xf32> to vector<16x8xf32>
    %71 = vector.extract_strided_slice %9 {offsets = [0, 24], sizes = [16, 8], strides = [1, 1]} : vector<16x32xf32> to vector<16x8xf32>
    %cst_25 = arith.constant dense<0.000000e+00> : vector<16x16xf32>
    %72 = tpu.matmul %69, %70, %cst_25 {dimension_numbers = #tpu.dot_dimension_numbers<[1], [1], [0], [0], [0, 0, 1, 0], [], []>} : vector<16x8xf32>, vector<16x8xf32>, vector<16x16xf32> -> vector<16x16xf32>
    %73 = arith.addf %72, %1 : vector<16x16xf32>
    %cst_26 = arith.constant dense<0xFF800000> : vector<16xf32>
    %74 = vector.multi_reduction <maximumf>, %73, %cst_26 [1] : vector<16x16xf32> to vector<16xf32>
    %75 = vector.shape_cast %74 : vector<16xf32> to vector<16x1xf32>
    %76 = vector.broadcast %75 : vector<16x1xf32> to vector<16x16xf32>
    %77 = arith.subf %73, %76 : vector<16x16xf32>
    %78 = math.exp %77 : vector<16x16xf32>
    %cst_27 = arith.constant dense<0.000000e+00> : vector<16xf32>
    %79 = vector.multi_reduction <add>, %78, %cst_27 [1] : vector<16x16xf32> to vector<16xf32>
    %80 = vector.shape_cast %79 : vector<16xf32> to vector<16x1xf32>
    %81 = tpu.reciprocal %80 : vector<16x1xf32> -> vector<16x1xf32>
    %82 = vector.broadcast %81 : vector<16x1xf32> to vector<16x16xf32>
    %83 = arith.mulf %78, %82 : vector<16x16xf32>
    %cst_28 = arith.constant dense<0.000000e+00> : vector<16x8xf32>
    %84 = tpu.matmul %83, %71, %cst_28 {dimension_numbers = #tpu.dot_dimension_numbers<[1], [0], [0], [1], [0, 0, 1, 1], [], []>} : vector<16x16xf32>, vector<16x8xf32>, vector<16x8xf32> -> vector<16x8xf32>
    %85 = vector.extract_strided_slice %10 {offsets = [24, 0], sizes = [8, 32], strides = [1, 1]} : vector<32x32xf32> to vector<8x32xf32>
    %cst_29 = arith.constant dense<0.000000e+00> : vector<16x32xf32>
    %86 = tpu.matmul %84, %85, %cst_29 {dimension_numbers = #tpu.dot_dimension_numbers<[1], [0], [0], [1], [0, 0, 1, 1], [], []>} : vector<16x8xf32>, vector<8x32xf32>, vector<16x32xf32> -> vector<16x32xf32>
    %87 = arith.addf %68, %86 : vector<16x32xf32>
    %c0_30 = arith.constant 0 : index
    %c0_31 = arith.constant 0 : index
    %88 = vector.load %arg5[%c0_30, %c0_31] : memref<1x32xf32, #tpu.memory_space<vmem>>, vector<1x32xf32>
    %89 = vector.broadcast %88 : vector<1x32xf32> to vector<16x32xf32>
    %90 = arith.addf %87, %89 : vector<16x32xf32>
    %91 = arith.addf %0, %90 : vector<16x32xf32>
    %c0_32 = arith.constant 0 : index
    %c0_33 = arith.constant 0 : index
    %92 = vector.load %arg10[%c0_32, %c0_33] : memref<1x32xf32, #tpu.memory_space<vmem>>, vector<1x32xf32>
    %c0_34 = arith.constant 0 : index
    %c0_35 = arith.constant 0 : index
    %93 = vector.load %arg11[%c0_34, %c0_35] : memref<1x32xf32, #tpu.memory_space<vmem>>, vector<1x32xf32>
    %cst_36 = arith.constant dense<0.000000e+00> : vector<16xf32>
    %94 = vector.multi_reduction <add>, %91, %cst_36 [1] : vector<16x32xf32> to vector<16xf32>
    %95 = vector.shape_cast %94 : vector<16xf32> to vector<16x1xf32>
    %cst_37 = arith.constant 3.200000e+01 : f32
    %96 = vector.broadcast %cst_37 : f32 to vector<16x1xf32>
    %97 = arith.divf %95, %96 : vector<16x1xf32>
    %98 = vector.broadcast %97 : vector<16x1xf32> to vector<16x32xf32>
    %99 = arith.subf %91, %98 : vector<16x32xf32>
    %100 = arith.mulf %99, %99 : vector<16x32xf32>
    %cst_38 = arith.constant dense<0.000000e+00> : vector<16xf32>
    %101 = vector.multi_reduction <add>, %100, %cst_38 [1] : vector<16x32xf32> to vector<16xf32>
    %102 = vector.shape_cast %101 : vector<16xf32> to vector<16x1xf32>
    %cst_39 = arith.constant 3.200000e+01 : f32
    %103 = vector.broadcast %cst_39 : f32 to vector<16x1xf32>
    %104 = arith.divf %102, %103 : vector<16x1xf32>
    %105 = vector.broadcast %97 : vector<16x1xf32> to vector<16x32xf32>
    %106 = arith.subf %91, %105 : vector<16x32xf32>
    %cst_40 = arith.constant 9.99999974E-6 : f32
    %107 = vector.broadcast %cst_40 : f32 to vector<16x1xf32>
    %108 = arith.addf %104, %107 : vector<16x1xf32>
    %109 = math.rsqrt %108 : vector<16x1xf32>
    %110 = vector.broadcast %109 : vector<16x1xf32> to vector<16x32xf32>
    %111 = arith.mulf %106, %110 : vector<16x32xf32>
    %112 = vector.broadcast %92 : vector<1x32xf32> to vector<16x32xf32>
    %113 = arith.mulf %111, %112 : vector<16x32xf32>
    %114 = vector.broadcast %93 : vector<1x32xf32> to vector<16x32xf32>
    %115 = arith.addf %113, %114 : vector<16x32xf32>
    %c0_41 = arith.constant 0 : index
    %c0_42 = arith.constant 0 : index
    %116 = vector.load %arg6[%c0_41, %c0_42] : memref<32x64xf32, #tpu.memory_space<vmem>>, vector<32x64xf32>
    %cst_43 = arith.constant dense<0.000000e+00> : vector<16x64xf32>
    %117 = tpu.matmul %115, %116, %cst_43 {dimension_numbers = #tpu.dot_dimension_numbers<[1], [0], [0], [1], [0, 0, 1, 1], [], []>} : vector<16x32xf32>, vector<32x64xf32>, vector<16x64xf32> -> vector<16x64xf32>
    %c0_44 = arith.constant 0 : index
    %c0_45 = arith.constant 0 : index
    %118 = vector.load %arg7[%c0_44, %c0_45] : memref<1x64xf32, #tpu.memory_space<vmem>>, vector<1x64xf32>
    %119 = vector.broadcast %118 : vector<1x64xf32> to vector<16x64xf32>
    %120 = arith.addf %117, %119 : vector<16x64xf32>
    %cst_46 = arith.constant 0.000000e+00 : f32
    %121 = vector.broadcast %cst_46 : f32 to vector<16x64xf32>
    %122 = arith.maximumf %120, %121 : vector<16x64xf32>
    %c0_47 = arith.constant 0 : index
    %c0_48 = arith.constant 0 : index
    %123 = vector.load %arg8[%c0_47, %c0_48] : memref<64x32xf32, #tpu.memory_space<vmem>>, vector<64x32xf32>
    %cst_49 = arith.constant dense<0.000000e+00> : vector<16x32xf32>
    %124 = tpu.matmul %122, %123, %cst_49 {dimension_numbers = #tpu.dot_dimension_numbers<[1], [0], [0], [1], [0, 0, 1, 1], [], []>} : vector<16x64xf32>, vector<64x32xf32>, vector<16x32xf32> -> vector<16x32xf32>
    %c0_50 = arith.constant 0 : index
    %c0_51 = arith.constant 0 : index
    %125 = vector.load %arg9[%c0_50, %c0_51] : memref<1x32xf32, #tpu.memory_space<vmem>>, vector<1x32xf32>
    %126 = vector.broadcast %125 : vector<1x32xf32> to vector<16x32xf32>
    %127 = arith.addf %124, %126 : vector<16x32xf32>
    %128 = arith.addf %115, %127 : vector<16x32xf32>
    %c0_52 = arith.constant 0 : index
    %c0_53 = arith.constant 0 : index
    %129 = vector.load %arg12[%c0_52, %c0_53] : memref<1x32xf32, #tpu.memory_space<vmem>>, vector<1x32xf32>
    %c0_54 = arith.constant 0 : index
    %c0_55 = arith.constant 0 : index
    %130 = vector.load %arg13[%c0_54, %c0_55] : memref<1x32xf32, #tpu.memory_space<vmem>>, vector<1x32xf32>
    %cst_56 = arith.constant dense<0.000000e+00> : vector<16xf32>
    %131 = vector.multi_reduction <add>, %128, %cst_56 [1] : vector<16x32xf32> to vector<16xf32>
    %132 = vector.shape_cast %131 : vector<16xf32> to vector<16x1xf32>
    %cst_57 = arith.constant 3.200000e+01 : f32
    %133 = vector.broadcast %cst_57 : f32 to vector<16x1xf32>
    %134 = arith.divf %132, %133 : vector<16x1xf32>
    %135 = vector.broadcast %134 : vector<16x1xf32> to vector<16x32xf32>
    %136 = arith.subf %128, %135 : vector<16x32xf32>
    %137 = arith.mulf %136, %136 : vector<16x32xf32>
    %cst_58 = arith.constant dense<0.000000e+00> : vector<16xf32>
    %138 = vector.multi_reduction <add>, %137, %cst_58 [1] : vector<16x32xf32> to vector<16xf32>
    %139 = vector.shape_cast %138 : vector<16xf32> to vector<16x1xf32>
    %cst_59 = arith.constant 3.200000e+01 : f32
    %140 = vector.broadcast %cst_59 : f32 to vector<16x1xf32>
    %141 = arith.divf %139, %140 : vector<16x1xf32>
    %142 = vector.broadcast %134 : vector<16x1xf32> to vector<16x32xf32>
    %143 = arith.subf %128, %142 : vector<16x32xf32>
    %cst_60 = arith.constant 9.99999974E-6 : f32
    %144 = vector.broadcast %cst_60 : f32 to vector<16x1xf32>
    %145 = arith.addf %141, %144 : vector<16x1xf32>
    %146 = math.rsqrt %145 : vector<16x1xf32>
    %147 = vector.broadcast %146 : vector<16x1xf32> to vector<16x32xf32>
    %148 = arith.mulf %143, %147 : vector<16x32xf32>
    %149 = vector.broadcast %129 : vector<1x32xf32> to vector<16x32xf32>
    %150 = arith.mulf %148, %149 : vector<16x32xf32>
    %151 = vector.broadcast %130 : vector<1x32xf32> to vector<16x32xf32>
    %152 = arith.addf %150, %151 : vector<16x32xf32>
    %c0_61 = arith.constant 0 : index
    %c0_62 = arith.constant 0 : index
    %153 = vector.load %arg14[%c0_61, %c0_62] : memref<16x32xf32, #tpu.memory_space<vmem>>, vector<16x32xf32>
    tpu.vector_store %arg14[%c0_61, %c0_62], %152 {strides = array<i32>} : memref<16x32xf32, #tpu.memory_space<vmem>>, vector<16x32xf32>,
    return
  }
}

</mosaic_0001>

<llo_original>
// kernel: encoder_layer_forward.1
$region0: #{encoder_layer_forward.1}
  #allocation0 [shape = 'u32[]', space=smem, size = 0x4, offset = 0x4, fixed_abs, tag = 'smem constant byte address 0x4 - core index']
  #allocation1 [shape = 'u32[144,128]{1,0:T(1,128)}', space=vmem, size = 0x12000, scoped, tag = 'internal scratch']
  %s0 = inlined_call_operand.vmem [shape: f32[16,32], index: 0, kind: input, shape index: {}]
  %s1 = inlined_call_operand.vmem [shape: f32[16,16], index: 1, kind: input, shape index: {}]
  %s2 = inlined_call_operand.vmem [shape: f32[32,96], index: 2, kind: input, shape index: {}]
  %s3 = inlined_call_operand.vmem [shape: f32[1,96], index: 3, kind: input, shape index: {}]
  %s4 = inlined_call_operand.vmem [shape: f32[32,32], index: 4, kind: input, shape index: {}]
  %s5 = inlined_call_operand.vmem [shape: f32[1,32], index: 5, kind: input, shape index: {}]
  %s6 = inlined_call_operand.vmem [shape: f32[32,64], index: 6, kind: input, shape index: {}]
  %s7 = inlined_call_operand.vmem [shape: f32[1,64], index: 7, kind: input, shape index: {}]
  %s8 = inlined_call_operand.vmem [shape: f32[64,32], index: 8, kind: input, shape index: {}]
  %s9 = inlined_call_operand.vmem [shape: f32[1,32], index: 9, kind: input, shape index: {}]
  %s10 = inlined_call_operand.vmem [shape: f32[1,32], index: 10, kind: input, shape index: {}]
  %s11 = inlined_call_operand.vmem [shape: f32[1,32], index: 11, kind: input, shape index: {}]
  %s12 = inlined_call_operand.vmem [shape: f32[1,32], index: 12, kind: input, shape index: {}]
  %s13 = inlined_call_operand.vmem [shape: f32[1,32], index: 13, kind: input, shape index: {}]
  %s14 = inlined_call_operand.vmem [shape: f32[16,32], index: 14, kind: output, shape index: {}]
  %s15 = sld [smem:[#allocation0]]
  $region66: #{encoder_layer_forward.1} parent=0
    _
  %s17 = ssub.s32 1, %s15
  %s18 = scalar_select 0, %s17, %s15
  // Predicated region
  $region2: #{encoder_layer_forward.1} parent=0 // pred_check
    _
  $region3: #{encoder_layer_forward.1} parent=0 // pred_check_branch
    %20 = sbr.rel (0) target = $region5
  $region4: #{encoder_layer_forward.1} parent=0 // pred_region
    _
  $region5: #{encoder_layer_forward.1} parent=0 // pred_fallthru
    _
  // Predicated region
  $region6: #{encoder_layer_forward.1} parent=0 // pred_check
    _
  $region7: #{encoder_layer_forward.1} parent=0 // pred_check_branch
    %22 = sbr.rel (0) target = $region9
  $region8: #{encoder_layer_forward.1} parent=0 // pred_region
    _
  $region9: #{encoder_layer_forward.1} parent=0 // pred_fallthru
    _
  // Predicated region
  $region10: #{encoder_layer_forward.1} parent=0 // pred_check
    _
  $region11: #{encoder_layer_forward.1} parent=0 // pred_check_branch
    %24 = sbr.rel (0) target = $region13
  $region12: #{encoder_layer_forward.1} parent=0 // pred_region
    _
  $region13: #{encoder_layer_forward.1} parent=0 // pred_fallthru
    _
  // Predicated region
  $region14: #{encoder_layer_forward.1} parent=0 // pred_check
    _
  $region15: #{encoder_layer_forward.1} parent=0 // pred_check_branch
    %26 = sbr.rel (0) target = $region17
  $region16: #{encoder_layer_forward.1} parent=0 // pred_region
    _
  $region17: #{encoder_layer_forward.1} parent=0 // pred_fallthru
    _
  // Predicated region
  $region18: #{encoder_layer_forward.1} parent=0 // pred_check
    _
  $region19: #{encoder_layer_forward.1} parent=0 // pred_check_branch
    %28 = sbr.rel (0) target = $region21
  $region20: #{encoder_layer_forward.1} parent=0 // pred_region
    _
  $region21: #{encoder_layer_forward.1} parent=0 // pred_fallthru
    _
  // Predicated region
  $region22: #{encoder_layer_forward.1} parent=0 // pred_check
    _
  $region23: #{encoder_layer_forward.1} parent=0 // pred_check_branch
    %30 = sbr.rel (0) target = $region25
  $region24: #{encoder_layer_forward.1} parent=0 // pred_region
    _
  $region25: #{encoder_layer_forward.1} parent=0 // pred_fallthru
    _
  // Predicated region
  $region26: #{encoder_layer_forward.1} parent=0 // pred_check
    _
  $region27: #{encoder_layer_forward.1} parent=0 // pred_check_branch
    %32 = sbr.rel (0) target = $region29
  $region28: #{encoder_layer_forward.1} parent=0 // pred_region
    _
  $region29: #{encoder_layer_forward.1} parent=0 // pred_fallthru
    _
  // Predicated region
  $region30: #{encoder_layer_forward.1} parent=0 // pred_check
    _
  $region31: #{encoder_layer_forward.1} parent=0 // pred_check_branch
    %34 = sbr.rel (0) target = $region33
  $region32: #{encoder_layer_forward.1} parent=0 // pred_region
    _
  $region33: #{encoder_layer_forward.1} parent=0 // pred_fallthru
    _
  // Predicated region
  $region34: #{encoder_layer_forward.1} parent=0 // pred_check
    _
  $region35: #{encoder_layer_forward.1} parent=0 // pred_check_branch
    %36 = sbr.rel (0) target = $region37
  $region36: #{encoder_layer_forward.1} parent=0 // pred_region
    _
  $region37: #{encoder_layer_forward.1} parent=0 // pred_fallthru
    _
  // Predicated region
  $region38: #{encoder_layer_forward.1} parent=0 // pred_check
    _
  $region39: #{encoder_layer_forward.1} parent=0 // pred_check_branch
    %38 = sbr.rel (0) target = $region41
  $region40: #{encoder_layer_forward.1} parent=0 // pred_region
    _
  $region41: #{encoder_layer_forward.1} parent=0 // pred_fallthru
    _
  // Predicated region
  $region42: #{encoder_layer_forward.1} parent=0 // pred_check
    _
  $region43: #{encoder_layer_forward.1} parent=0 // pred_check_branch
    %40 = sbr.rel (0) target = $region45
  $region44: #{encoder_layer_forward.1} parent=0 // pred_region
    _
  $region45: #{encoder_layer_forward.1} parent=0 // pred_fallthru
    _
  // Predicated region
  $region46: #{encoder_layer_forward.1} parent=0 // pred_check
    _
  $region47: #{encoder_layer_forward.1} parent=0 // pred_check_branch
    %42 = sbr.rel (0) target = $region49
  $region48: #{encoder_layer_forward.1} parent=0 // pred_region
    _
  $region49: #{encoder_layer_forward.1} parent=0 // pred_fallthru
    _
  // Predicated region
  $region50: #{encoder_layer_forward.1} parent=0 // pred_check
    _
  $region51: #{encoder_layer_forward.1} parent=0 // pred_check_branch
    %44 = sbr.rel (0) target = $region53
  $region52: #{encoder_layer_forward.1} parent=0 // pred_region
    _
  $region53: #{encoder_layer_forward.1} parent=0 // pred_fallthru
    _
  // Predicated region
  $region54: #{encoder_layer_forward.1} parent=0 // pred_check
    _
  $region55: #{encoder_layer_forward.1} parent=0 // pred_check_branch
    %46 = sbr.rel (0) target = $region57
  $region56: #{encoder_layer_forward.1} parent=0 // pred_region
    _
  $region57: #{encoder_layer_forward.1} parent=0 // pred_fallthru
    _
  %v47 = vld [vmem:[%s0] sm:$0xff]
  %v48 = vld [vmem:[%s0 + $0x8] sm:$0xff]
  %v49 = vld [vmem:[%s1] sm:$0xff]
  %v50 = vld [vmem:[%s1 + $0x8] sm:$0xff]
  %v51 = vld [vmem:[%s2] sm:$0xff]
  %v52 = vld [vmem:[%s2 + $0x8] sm:$0xff]
  %v53 = vld [vmem:[%s2 + $0x10] sm:$0xff]
  %v54 = vld [vmem:[%s2 + $0x18] sm:$0xff]
  %v55 = vld [vmem:[%s3] sm:$0x1]
  %v57 = vlaneseq
  %v58 = vshrl.u32 %v57, 7
  %v59 = vsub.s32 0, %v58
  %v60 = vrot.slane %v55, %v59
  %vm62 = vcmask 261120
  %v64 = vsel %vm62, %v47, 0
  %v67 = vsel %vm62, %v48, 0
  %69 = vmatprep.subr.mxu0 0.0
  %70 = vmatpush1.msra.mxu0 %v51
  %71 = vmatprep.subr.mxu0 0.0
  %72 = vmatpush1.msra.mxu0 %v52
  %73 = vmatprep.subr.mxu0 0.0
  %74 = vmatpush1.msra.mxu0 %v53
  %75 = vmatprep.subr.mxu0 0.0
  %76 = vmatpush1.msra.mxu0 %v54
  %77 = vmatprep.subr.mxu0 0.0
  %78 = vmatpush1.msra.mxu0 0.0
  %79 = vmatprep.subr.mxu0 0.0
  %80 = vmatpush1.msra.mxu0 0.0
  %81 = vmatprep.subr.mxu0 0.0
  %82 = vmatpush1.msra.mxu0 0.0
  %83 = vmatprep.subr.mxu0 0.0
  %84 = vmatpush1.msra.mxu0 0.0
  %85 = vmatprep.subr.mxu0 0.0
  %86 = vmatpush1.msra.mxu0 0.0
  %87 = vmatprep.subr.mxu0 0.0
  %88 = vmatpush1.msra.mxu0 0.0
  %89 = vmatprep.subr.mxu0 0.0
  %90 = vmatpush1.msra.mxu0 0.0
  %91 = vmatprep.subr.mxu0 0.0
  %92 = vmatpush1.msra.mxu0 0.0
  %93 = vmatprep.subr.mxu0 0.0
  %94 = vmatpush1.msra.mxu0 0.0
  %95 = vmatprep.subr.mxu0 0.0
  %96 = vmatpush1.msra.mxu0 0.0
  %97 = vmatprep.subr.mxu0 0.0
  %98 = vmatpush1.msra.mxu0 0.0
  %99 = vmatprep.subr.mxu0 0.0
  %100 = vmatpush1.msra.mxu0 0.0
  %101 = vmatprep.subr.mxu0 0.0
  %102 = vmatpush1.msra.mxu0 0.0
  %103 = vmatprep.subr.mxu0 0.0
  %104 = vmatpush1.msra.mxu0 0.0
  %105 = vmatprep.subr.mxu0 0.0
  %106 = vmatpush1.msra.mxu0 0.0
  %107 = vmatprep.subr.mxu0 0.0
  %108 = vmatpush1.msra.mxu0 0.0
  %109 = vmatprep.subr.mxu0 0.0
  %110 = vmatpush1.msra.mxu0 0.0
  %111 = vmatprep.subr.mxu0 0.0
  %112 = vmatpush1.msra.mxu0 0.0
  %113 = vmatprep.subr.mxu0 0.0
  %114 = vmatpush1.msra.mxu0 0.0
  %115 = vmatprep.subr.mxu0 0.0
  %116 = vmatpush1.msra.mxu0 0.0
  %117 = vmatprep.subr.mxu0 0.0
  %118 = vmatpush1.msra.mxu0 0.0
  %119 = vmatprep.subr.mxu0 0.0
  %120 = vmatpush1.msra.mxu0 0.0
  %121 = vmatprep.subr.mxu0 0.0
  %122 = vmatpush1.msra.mxu0 0.0
  %123 = vmatprep.subr.mxu0 0.0
  %124 = vmatpush1.msra.mxu0 0.0
  %125 = vmatprep.subr.mxu0 0.0
  %126 = vmatpush1.msra.mxu0 0.0
  %127 = vmatprep.subr.mxu0 0.0
  %128 = vmatpush1.msra.mxu0 0.0
  %129 = vmatprep.subr.mxu0 0.0
  %130 = vmatpush1.msra.mxu0 0.0
  %131 = vmatprep.subr.mxu0 0.0
  %132 = vmatpush1.msra.mxu0 0.0
  %133 = vmatprep.mubr.f32.mxu0 0.0
  %134 = vmatmul.mubr.f32.gmra.mrb[0].mxu0 %v64
  %v135 = vpop.f32.mrb[0].mxu0
  %v136 = vadd.f32 %v60, %v135
  %v137 = vpop.f32.mrb[0].mxu0
  %138 = vmatprep.mubr.f32.mxu0 0.0
  %139 = vmatmul.mubr.f32.gmra.mrb[0].mxu0 %v67
  %v140 = vpop.f32.mrb[0].mxu0
  %v141 = vadd.f32 %v60, %v140
  %v142 = vpop.f32.mrb[0].mxu0
  %143 = vdwg.mxu0
  %v144 = vld [vmem:[%s4] sm:$0xff]
  %v145 = vld [vmem:[%s4 + $0x8] sm:$0xff]
  %v146 = vld [vmem:[%s4 + $0x10] sm:$0xff]
  %v147 = vld [vmem:[%s4 + $0x18] sm:$0xff]
  %150 = vrot.lane.b32.xlu0 %v136, 96
  %v151 = vpop.permute.xlu0 %150
  %152 = vrot.lane.b32.xlu0 %v141, 96
  %v153 = vpop.permute.xlu0 %152
  %vm154 = vcmask 64512
  %v155 = vsel %vm154, %v136, 0
  %v157 = vsel %vm154, %v141, 0
  %v159 = vsel %vm154, %v151, 0
  %v161 = vsel %vm154, %v153, 0
  %163 = vmatprep.subr.mxu0 0.0
  %164 = vmatpush1.xpose.msra.mxu0 %v159
  %165 = vmatprep.subr.mxu0 0.0
  %166 = vmatpush1.xpose.msra.mxu0 %v161
  %167 = vmatprep.subr.mxu0 0.0
  %168 = vmatpush1.xpose.msra.mxu0 0.0
  %169 = vmatprep.subr.mxu0 0.0
  %170 = vmatpush1.xpose.msra.mxu0 0.0
  %171 = vmatprep.subr.mxu0 0.0
  %172 = vmatpush1.xpose.msra.mxu0 0.0
  %173 = vmatprep.subr.mxu0 0.0
  %174 = vmatpush1.xpose.msra.mxu0 0.0
  %175 = vmatprep.subr.mxu0 0.0
  %176 = vmatpush1.xpose.msra.mxu0 0.0
  %177 = vmatprep.subr.mxu0 0.0
  %178 = vmatpush1.xpose.msra.mxu0 0.0
  %179 = vmatprep.subr.mxu0 0.0
  %180 = vmatpush1.xpose.msra.mxu0 0.0
  %181 = vmatprep.subr.mxu0 0.0
  %182 = vmatpush1.xpose.msra.mxu0 0.0
  %183 = vmatprep.subr.mxu0 0.0
  %184 = vmatpush1.xpose.msra.mxu0 0.0
  %185 = vmatprep.subr.mxu0 0.0
  %186 = vmatpush1.xpose.msra.mxu0 0.0
  %187 = vmatprep.subr.mxu0 0.0
  %188 = vmatpush1.xpose.msra.mxu0 0.0
  %189 = vmatprep.subr.mxu0 0.0
  %190 = vmatpush1.xpose.msra.mxu0 0.0
  %191 = vmatprep.subr.mxu0 0.0
  %192 = vmatpush1.xpose.msra.mxu0 0.0
  %193 = vmatprep.subr.mxu0 0.0
  %194 = vmatpush1.xpose.msra.mxu0 0.0
  %195 = vmatprep.subr.mxu0 0.0
  %196 = vmatpush1.xpose.msra.mxu0 0.0
  %197 = vmatprep.subr.mxu0 0.0
  %198 = vmatpush1.xpose.msra.mxu0 0.0
  %199 = vmatprep.subr.mxu0 0.0
  %200 = vmatpush1.xpose.msra.mxu0 0.0
  %201 = vmatprep.subr.mxu0 0.0
  %202 = vmatpush1.xpose.msra.mxu0 0.0
  %203 = vmatprep.subr.mxu0 0.0
  %204 = vmatpush1.xpose.msra.mxu0 0.0
  %205 = vmatprep.subr.mxu0 0.0
  %206 = vmatpush1.xpose.msra.mxu0 0.0
  %207 = vmatprep.subr.mxu0 0.0
  %208 = vmatpush1.xpose.msra.mxu0 0.0
  %209 = vmatprep.subr.mxu0 0.0
  %210 = vmatpush1.xpose.msra.mxu0 0.0
  %211 = vmatprep.subr.mxu0 0.0
  %212 = vmatpush1.xpose.msra.mxu0 0.0
  %213 = vmatprep.subr.mxu0 0.0
  %214 = vmatpush1.xpose.msra.mxu0 0.0
  %215 = vmatprep.subr.mxu0 0.0
  %216 = vmatpush1.xpose.msra.mxu0 0.0
  %217 = vmatprep.subr.mxu0 0.0
  %218 = vmatpush1.xpose.msra.mxu0 0.0
  %219 = vmatprep.subr.mxu0 0.0
  %220 = vmatpush1.xpose.msra.mxu0 0.0
  %221 = vmatprep.subr.mxu0 0.0
  %222 = vmatpush1.xpose.msra.mxu0 0.0
  %223 = vmatprep.subr.mxu0 0.0
  %224 = vmatpush1.xpose.msra.mxu0 0.0
  %225 = vmatprep.subr.mxu0 0.0
  %226 = vmatpush1.xpose.msra.mxu0 0.0
  %227 = vmatprep.mubr.f32.mxu0 0.0
  %228 = vmatmul.mubr.f32.gmra.mrb[0].mxu0 %v155
  %v229 = vpop.f32.mrb[0].mxu0
  %v230 = vadd.f32 %v49, %v229
  %v231 = vpop.f32.mrb[0].mxu0
  %232 = vmatprep.mubr.f32.mxu0 0.0
  %233 = vmatmul.mubr.f32.gmra.mrb[0].mxu0 %v157
  %v234 = vpop.f32.mrb[0].mxu0
  %v235 = vadd.f32 %v50, %v234
  %v236 = vpop.f32.mrb[0].mxu0
  %237 = vdwg.mxu0
  %vm238 = vcmask 130048
  %v239 = vsel %vm238, %v230, -inf
  %240 = vmax.xlane.f32.xlu0 %v239
  %v241 = vpop.xlane.xlu0 %240
  %v242 = vsel %vm238, %v235, -inf
  %243 = vmax.xlane.f32.xlu0 %v242
  %v244 = vpop.xlane.xlu0 %243
  %v245 = vsub.f32 %v230, %v241
  %v246 = vsub.f32 %v235, %v244
  %v247 = vmul.f32 %v245, 1.442695
  %v248 = vpow.pop %v247
  %v249 = vmul.f32 %v246, 1.442695
  %v250 = vpow.pop %v249
  %v251 = vsel %vm238, %v248, 0.0
  %252 = vadd.xlane.f32.xlu0 %v251
  %v253 = vpop.xlane.xlu0 %252
  %v254 = vsel %vm238, %v250, 0.0
  %255 = vadd.xlane.f32.xlu0 %v254
  %v256 = vpop.xlane.xlu0 %255
  %v257 = vrcp.pop %v253
  %v258 = vrcp.pop %v256
  %v259 = vmul.f32 %v248, %v257
  %v260 = vmul.f32 %v250, %v258
  %261 = vrot.lane.b32.xlu0 %v136, 64
  %v262 = vpop.permute.xlu0 %261
  %263 = vrot.lane.b32.xlu0 %v141, 64
  %v264 = vpop.permute.xlu0 %263
  %v268 = vsel %vm238, %v259, 0
  %v271 = vsel %vm238, %v260, 0
  %273 = vmatprep.subr.mxu0 0.0
  %274 = vmatpush1.msra.mxu0 %v262
  %275 = vmatprep.subr.mxu0 0.0
  %276 = vmatpush1.msra.mxu0 %v264
  %277 = vmatprep.subr.mxu0 0.0
  %278 = vmatpush1.msra.mxu0 0.0
  %279 = vmatprep.subr.mxu0 0.0
  %280 = vmatpush1.msra.mxu0 0.0
  %281 = vmatprep.subr.mxu0 0.0
  %282 = vmatpush1.msra.mxu0 0.0
  %283 = vmatprep.subr.mxu0 0.0
  %284 = vmatpush1.msra.mxu0 0.0
  %285 = vmatprep.subr.mxu0 0.0
  %286 = vmatpush1.msra.mxu0 0.0
  %287 = vmatprep.subr.mxu0 0.0
  %288 = vmatpush1.msra.mxu0 0.0
  %289 = vmatprep.subr.mxu0 0.0
  %290 = vmatpush1.msra.mxu0 0.0
  %291 = vmatprep.subr.mxu0 0.0
  %292 = vmatpush1.msra.mxu0 0.0
  %293 = vmatprep.subr.mxu0 0.0
  %294 = vmatpush1.msra.mxu0 0.0
  %295 = vmatprep.subr.mxu0 0.0
  %296 = vmatpush1.msra.mxu0 0.0
  %297 = vmatprep.subr.mxu0 0.0
  %298 = vmatpush1.msra.mxu0 0.0
  %299 = vmatprep.subr.mxu0 0.0
  %300 = vmatpush1.msra.mxu0 0.0
  %301 = vmatprep.subr.mxu0 0.0
  %302 = vmatpush1.msra.mxu0 0.0
  %303 = vmatprep.subr.mxu0 0.0
  %304 = vmatpush1.msra.mxu0 0.0
  %305 = vmatprep.subr.mxu0 0.0
  %306 = vmatpush1.msra.mxu0 0.0
  %307 = vmatprep.subr.mxu0 0.0
  %308 = vmatpush1.msra.mxu0 0.0
  %309 = vmatprep.subr.mxu0 0.0
  %310 = vmatpush1.msra.mxu0 0.0
  %311 = vmatprep.subr.mxu0 0.0
  %312 = vmatpush1.msra.mxu0 0.0
  %313 = vmatprep.subr.mxu0 0.0
  %314 = vmatpush1.msra.mxu0 0.0
  %315 = vmatprep.subr.mxu0 0.0
  %316 = vmatpush1.msra.mxu0 0.0
  %317 = vmatprep.subr.mxu0 0.0
  %318 = vmatpush1.msra.mxu0 0.0
  %319 = vmatprep.subr.mxu0 0.0
  %320 = vmatpush1.msra.mxu0 0.0
  %321 = vmatprep.subr.mxu0 0.0
  %322 = vmatpush1.msra.mxu0 0.0
  %323 = vmatprep.subr.mxu0 0.0
  %324 = vmatpush1.msra.mxu0 0.0
  %325 = vmatprep.subr.mxu0 0.0
  %326 = vmatpush1.msra.mxu0 0.0
  %327 = vmatprep.subr.mxu0 0.0
  %328 = vmatpush1.msra.mxu0 0.0
  %329 = vmatprep.subr.mxu0 0.0
  %330 = vmatpush1.msra.mxu0 0.0
  %331 = vmatprep.subr.mxu0 0.0
  %332 = vmatpush1.msra.mxu0 0.0
  %333 = vmatprep.subr.mxu0 0.0
  %334 = vmatpush1.msra.mxu0 0.0
  %335 = vmatprep.subr.mxu0 0.0
  %336 = vmatpush1.msra.mxu0 0.0
  %337 = vmatprep.mubr.f32.mxu0 0.0
  %338 = vmatmul.mubr.f32.gmra.mrb[0].mxu0 %v268
  %v339 = vpop.f32.mrb[0].mxu0
  %v340 = vadd.f32 0.0, %v339
  %v341 = vpop.f32.mrb[0].mxu0
  %342 = vmatprep.mubr.f32.mxu0 0.0
  %343 = vmatmul.mubr.f32.gmra.mrb[0].mxu0 %v271
  %v344 = vpop.f32.mrb[0].mxu0
  %v345 = vadd.f32 0.0, %v344
  %v346 = vpop.f32.mrb[0].mxu0
  %347 = vdwg.mxu0
  %348 = vrot.lane.b32.xlu0 %v136, 120
  %v349 = vpop.permute.xlu0 %348
  %350 = vrot.lane.b32.xlu0 %v141, 120
  %v351 = vpop.permute.xlu0 %350
  %352 = vrot.lane.b32.xlu0 %v136, 88
  %v353 = vpop.permute.xlu0 %352
  %354 = vrot.lane.b32.xlu0 %v141, 88
  %v355 = vpop.permute.xlu0 %354
  %v356 = vsel %vm154, %v349, 0
  %v358 = vsel %vm154, %v351, 0
  %v360 = vsel %vm154, %v353, 0
  %v362 = vsel %vm154, %v355, 0
  %364 = vmatprep.subr.mxu0 0.0
  %365 = vmatpush1.xpose.msra.mxu0 %v360
  %366 = vmatprep.subr.mxu0 0.0
  %367 = vmatpush1.xpose.msra.mxu0 %v362
  %368 = vmatprep.subr.mxu0 0.0
  %369 = vmatpush1.xpose.msra.mxu0 0.0
  %370 = vmatprep.subr.mxu0 0.0
  %371 = vmatpush1.xpose.msra.mxu0 0.0
  %372 = vmatprep.subr.mxu0 0.0
  %373 = vmatpush1.xpose.msra.mxu0 0.0
  %374 = vmatprep.subr.mxu0 0.0
  %375 = vmatpush1.xpose.msra.mxu0 0.0
  %376 = vmatprep.subr.mxu0 0.0
  %377 = vmatpush1.xpose.msra.mxu0 0.0
  %378 = vmatprep.subr.mxu0 0.0
  %379 = vmatpush1.xpose.msra.mxu0 0.0
  %380 = vmatprep.subr.mxu0 0.0
  %381 = vmatpush1.xpose.msra.mxu0 0.0
  %382 = vmatprep.subr.mxu0 0.0
  %383 = vmatpush1.xpose.msra.mxu0 0.0
  %384 = vmatprep.subr.mxu0 0.0
  %385 = vmatpush1.xpose.msra.mxu0 0.0
  %386 = vmatprep.subr.mxu0 0.0
  %387 = vmatpush1.xpose.msra.mxu0 0.0
  %388 = vmatprep.subr.mxu0 0.0
  %389 = vmatpush1.xpose.msra.mxu0 0.0
  %390 = vmatprep.subr.mxu0 0.0
  %391 = vmatpush1.xpose.msra.mxu0 0.0
  %392 = vmatprep.subr.mxu0 0.0
  %393 = vmatpush1.xpose.msra.mxu0 0.0
  %394 = vmatprep.subr.mxu0 0.0
  %395 = vmatpush1.xpose.msra.mxu0 0.0
  %396 = vmatprep.subr.mxu0 0.0
  %397 = vmatpush1.xpose.msra.mxu0 0.0
  %398 = vmatprep.subr.mxu0 0.0
  %399 = vmatpush1.xpose.msra.mxu0 0.0
  %400 = vmatprep.subr.mxu0 0.0
  %401 = vmatpush1.xpose.msra.mxu0 0.0
  %402 = vmatprep.subr.mxu0 0.0
  %403 = vmatpush1.xpose.msra.mxu0 0.0
  %404 = vmatprep.subr.mxu0 0.0
  %405 = vmatpush1.xpose.msra.mxu0 0.0
  %406 = vmatprep.subr.mxu0 0.0
  %407 = vmatpush1.xpose.msra.mxu0 0.0
  %408 = vmatprep.subr.mxu0 0.0
  %409 = vmatpush1.xpose.msra.mxu0 0.0
  %410 = vmatprep.subr.mxu0 0.0
  %411 = vmatpush1.xpose.msra.mxu0 0.0
  %412 = vmatprep.subr.mxu0 0.0
  %413 = vmatpush1.xpose.msra.mxu0 0.0
  %414 = vmatprep.subr.mxu0 0.0
  %415 = vmatpush1.xpose.msra.mxu0 0.0
  %416 = vmatprep.subr.mxu0 0.0
  %417 = vmatpush1.xpose.msra.mxu0 0.0
  %418 = vmatprep.subr.mxu0 0.0
  %419 = vmatpush1.xpose.msra.mxu0 0.0
  %420 = vmatprep.subr.mxu0 0.0
  %421 = vmatpush1.xpose.msra.mxu0 0.0
  %422 = vmatprep.subr.mxu0 0.0
  %423 = vmatpush1.xpose.msra.mxu0 0.0
  %424 = vmatprep.subr.mxu0 0.0
  %425 = vmatpush1.xpose.msra.mxu0 0.0
  %426 = vmatprep.subr.mxu0 0.0
  %427 = vmatpush1.xpose.msra.mxu0 0.0
  %428 = vmatprep.mubr.f32.mxu0 0.0
  %429 = vmatmul.mubr.f32.gmra.mrb[0].mxu0 %v356
  %v430 = vpop.f32.mrb[0].mxu0
  %v431 = vadd.f32 %v49, %v430
  %v432 = vpop.f32.mrb[0].mxu0
  %433 = vmatprep.mubr.f32.mxu0 0.0
  %434 = vmatmul.mubr.f32.gmra.mrb[0].mxu0 %v358
  %v435 = vpop.f32.mrb[0].mxu0
  %v436 = vadd.f32 %v50, %v435
  %v437 = vpop.f32.mrb[0].mxu0
  %438 = vdwg.mxu0
  %v439 = vsel %vm238, %v431, -inf
  %440 = vmax.xlane.f32.xlu0 %v439
  %v441 = vpop.xlane.xlu0 %440
  %v442 = vsel %vm238, %v436, -inf
  %443 = vmax.xlane.f32.xlu0 %v442
  %v444 = vpop.xlane.xlu0 %443
  %v445 = vsub.f32 %v431, %v441
  %v446 = vsub.f32 %v436, %v444
  %v447 = vmul.f32 %v445, 1.442695
  %v448 = vpow.pop %v447
  %v449 = vmul.f32 %v446, 1.442695
  %v450 = vpow.pop %v449
  %v451 = vsel %vm238, %v448, 0.0
  %452 = vadd.xlane.f32.xlu0 %v451
  %v453 = vpop.xlane.xlu0 %452
  %v454 = vsel %vm238, %v450, 0.0
  %455 = vadd.xlane.f32.xlu0 %v454
  %v456 = vpop.xlane.xlu0 %455
  %v457 = vrcp.pop %v453
  %v458 = vrcp.pop %v456
  %v459 = vmul.f32 %v448, %v457
  %v460 = vmul.f32 %v450, %v458
  %461 = vrot.lane.b32.xlu0 %v136, 56
  %v462 = vpop.permute.xlu0 %461
  %463 = vrot.lane.b32.xlu0 %v141, 56
  %v464 = vpop.permute.xlu0 %463
  %v468 = vsel %vm238, %v459, 0
  %v471 = vsel %vm238, %v460, 0
  %473 = vmatprep.subr.mxu0 0.0
  %474 = vmatpush1.msra.mxu0 %v462
  %475 = vmatprep.subr.mxu0 0.0
  %476 = vmatpush1.msra.mxu0 %v464
  %477 = vmatprep.subr.mxu0 0.0
  %478 = vmatpush1.msra.mxu0 0.0
  %479 = vmatprep.subr.mxu0 0.0
  %480 = vmatpush1.msra.mxu0 0.0
  %481 = vmatprep.subr.mxu0 0.0
  %482 = vmatpush1.msra.mxu0 0.0
  %483 = vmatprep.subr.mxu0 0.0
  %484 = vmatpush1.msra.mxu0 0.0
  %485 = vmatprep.subr.mxu0 0.0
  %486 = vmatpush1.msra.mxu0 0.0
  %487 = vmatprep.subr.mxu0 0.0
  %488 = vmatpush1.msra.mxu0 0.0
  %489 = vmatprep.subr.mxu0 0.0
  %490 = vmatpush1.msra.mxu0 0.0
  %491 = vmatprep.subr.mxu0 0.0
  %492 = vmatpush1.msra.mxu0 0.0
  %493 = vmatprep.subr.mxu0 0.0
  %494 = vmatpush1.msra.mxu0 0.0
  %495 = vmatprep.subr.mxu0 0.0
  %496 = vmatpush1.msra.mxu0 0.0
  %497 = vmatprep.subr.mxu0 0.0
  %498 = vmatpush1.msra.mxu0 0.0
  %499 = vmatprep.subr.mxu0 0.0
  %500 = vmatpush1.msra.mxu0 0.0
  %501 = vmatprep.subr.mxu0 0.0
  %502 = vmatpush1.msra.mxu0 0.0
  %503 = vmatprep.subr.mxu0 0.0
  %504 = vmatpush1.msra.mxu0 0.0
  %505 = vmatprep.subr.mxu0 0.0
  %506 = vmatpush1.msra.mxu0 0.0
  %507 = vmatprep.subr.mxu0 0.0
  %508 = vmatpush1.msra.mxu0 0.0
  %509 = vmatprep.subr.mxu0 0.0
  %510 = vmatpush1.msra.mxu0 0.0
  %511 = vmatprep.subr.mxu0 0.0
  %512 = vmatpush1.msra.mxu0 0.0
  %513 = vmatprep.subr.mxu0 0.0
  %514 = vmatpush1.msra.mxu0 0.0
  %515 = vmatprep.subr.mxu0 0.0
  %516 = vmatpush1.msra.mxu0 0.0
  %517 = vmatprep.subr.mxu0 0.0
  %518 = vmatpush1.msra.mxu0 0.0
  %519 = vmatprep.subr.mxu0 0.0
  %520 = vmatpush1.msra.mxu0 0.0
  %521 = vmatprep.subr.mxu0 0.0
  %522 = vmatpush1.msra.mxu0 0.0
  %523 = vmatprep.subr.mxu0 0.0
  %524 = vmatpush1.msra.mxu0 0.0
  %525 = vmatprep.subr.mxu0 0.0
  %526 = vmatpush1.msra.mxu0 0.0
  %527 = vmatprep.subr.mxu0 0.0
  %528 = vmatpush1.msra.mxu0 0.0
  %529 = vmatprep.subr.mxu0 0.0
  %530 = vmatpush1.msra.mxu0 0.0
  %531 = vmatprep.subr.mxu0 0.0
  %532 = vmatpush1.msra.mxu0 0.0
  %533 = vmatprep.subr.mxu0 0.0
  %534 = vmatpush1.msra.mxu0 0.0
  %535 = vmatprep.subr.mxu0 0.0
  %536 = vmatpush1.msra.mxu0 0.0
  %537 = vmatprep.mubr.f32.mxu0 0.0
  %538 = vmatmul.mubr.f32.gmra.mrb[0].mxu0 %v468
  %v539 = vpop.f32.mrb[0].mxu0
  %v540 = vadd.f32 0.0, %v539
  %v541 = vpop.f32.mrb[0].mxu0
  %542 = vmatprep.mubr.f32.mxu0 0.0
  %543 = vmatmul.mubr.f32.gmra.mrb[0].mxu0 %v471
  %v544 = vpop.f32.mrb[0].mxu0
  %v545 = vadd.f32 0.0, %v544
  %v546 = vpop.f32.mrb[0].mxu0
  %547 = vdwg.mxu0
  %v549 = vsel %vm154, %v540, 0
  %v552 = vsel %vm154, %v545, 0
  %554 = vmatprep.subr.mxu0 0.0
  %555 = vmatpush1.msra.mxu0 %v145
  %556 = vmatprep.subr.mxu0 0.0
  %557 = vmatpush1.msra.mxu0 0.0
  %558 = vmatprep.subr.mxu0 0.0
  %559 = vmatpush1.msra.mxu0 0.0
  %560 = vmatprep.subr.mxu0 0.0
  %561 = vmatpush1.msra.mxu0 0.0
  %562 = vmatprep.subr.mxu0 0.0
  %563 = vmatpush1.msra.mxu0 0.0
  %564 = vmatprep.subr.mxu0 0.0
  %565 = vmatpush1.msra.mxu0 0.0
  %566 = vmatprep.subr.mxu0 0.0
  %567 = vmatpush1.msra.mxu0 0.0
  %568 = vmatprep.subr.mxu0 0.0
  %569 = vmatpush1.msra.mxu0 0.0
  %570 = vmatprep.subr.mxu0 0.0
  %571 = vmatpush1.msra.mxu0 0.0
  %572 = vmatprep.subr.mxu0 0.0
  %573 = vmatpush1.msra.mxu0 0.0
  %574 = vmatprep.subr.mxu0 0.0
  %575 = vmatpush1.msra.mxu0 0.0
  %576 = vmatprep.subr.mxu0 0.0
  %577 = vmatpush1.msra.mxu0 0.0
  %578 = vmatprep.subr.mxu0 0.0
  %579 = vmatpush1.msra.mxu0 0.0
  %580 = vmatprep.subr.mxu0 0.0
  %581 = vmatpush1.msra.mxu0 0.0
  %582 = vmatprep.subr.mxu0 0.0
  %583 = vmatpush1.msra.mxu0 0.0
  %584 = vmatprep.subr.mxu0 0.0
  %585 = vmatpush1.msra.mxu0 0.0
  %586 = vmatprep.subr.mxu0 0.0
  %587 = vmatpush1.msra.mxu0 0.0
  %588 = vmatprep.subr.mxu0 0.0
  %589 = vmatpush1.msra.mxu0 0.0
  %590 = vmatprep.subr.mxu0 0.0
  %591 = vmatpush1.msra.mxu0 0.0
  %592 = vmatprep.subr.mxu0 0.0
  %593 = vmatpush1.msra.mxu0 0.0
  %594 = vmatprep.subr.mxu0 0.0
  %595 = vmatpush1.msra.mxu0 0.0
  %596 = vmatprep.subr.mxu0 0.0
  %597 = vmatpush1.msra.mxu0 0.0
  %598 = vmatprep.subr.mxu0 0.0
  %599 = vmatpush1.msra.mxu0 0.0
  %600 = vmatprep.subr.mxu0 0.0
  %601 = vmatpush1.msra.mxu0 0.0
  %602 = vmatprep.subr.mxu0 0.0
  %603 = vmatpush1.msra.mxu0 0.0
  %604 = vmatprep.subr.mxu0 0.0
  %605 = vmatpush1.msra.mxu0 0.0
  %606 = vmatprep.subr.mxu0 0.0
  %607 = vmatpush1.msra.mxu0 0.0
  %608 = vmatprep.subr.mxu0 0.0
  %609 = vmatpush1.msra.mxu0 0.0
  %610 = vmatprep.subr.mxu0 0.0
  %611 = vmatpush1.msra.mxu0 0.0
  %612 = vmatprep.subr.mxu0 0.0
  %613 = vmatpush1.msra.mxu0 0.0
  %614 = vmatprep.subr.mxu0 0.0
  %615 = vmatpush1.msra.mxu0 0.0
  %616 = vmatprep.subr.mxu0 0.0
  %617 = vmatpush1.msra.mxu0 0.0
  %618 = vmatprep.mubr.f32.mxu0 0.0
  %619 = vmatmul.mubr.f32.gmra.mrb[0].mxu0 %v549
  %v620 = vpop.f32.mrb[0].mxu0
  %v621 = vadd.f32 0.0, %v620
  %v622 = vpop.f32.mrb[0].mxu0
  %623 = vmatprep.mubr.f32.mxu0 0.0
  %624 = vmatmul.mubr.f32.gmra.mrb[0].mxu0 %v552
  %v625 = vpop.f32.mrb[0].mxu0
  %v626 = vadd.f32 0.0, %v625
  %v627 = vpop.f32.mrb[0].mxu0
  %628 = vdwg.mxu0
  %v630 = vsel %vm154, %v340, 0
  %v633 = vsel %vm154, %v345, 0
  %635 = vmatprep.subr.mxu0 0.0
  %636 = vmatpush1.msra.mxu0 %v144
  %637 = vmatprep.subr.mxu0 0.0
  %638 = vmatpush1.msra.mxu0 0.0
  %639 = vmatprep.subr.mxu0 0.0
  %640 = vmatpush1.msra.mxu0 0.0
  %641 = vmatprep.subr.mxu0 0.0
  %642 = vmatpush1.msra.mxu0 0.0
  %643 = vmatprep.subr.mxu0 0.0
  %644 = vmatpush1.msra.mxu0 0.0
  %645 = vmatprep.subr.mxu0 0.0
  %646 = vmatpush1.msra.mxu0 0.0
  %647 = vmatprep.subr.mxu0 0.0
  %648 = vmatpush1.msra.mxu0 0.0
  %649 = vmatprep.subr.mxu0 0.0
  %650 = vmatpush1.msra.mxu0 0.0
  %651 = vmatprep.subr.mxu0 0.0
  %652 = vmatpush1.msra.mxu0 0.0
  %653 = vmatprep.subr.mxu0 0.0
  %654 = vmatpush1.msra.mxu0 0.0
  %655 = vmatprep.subr.mxu0 0.0
  %656 = vmatpush1.msra.mxu0 0.0
  %657 = vmatprep.subr.mxu0 0.0
  %658 = vmatpush1.msra.mxu0 0.0
  %659 = vmatprep.subr.mxu0 0.0
  %660 = vmatpush1.msra.mxu0 0.0
  %661 = vmatprep.subr.mxu0 0.0
  %662 = vmatpush1.msra.mxu0 0.0
  %663 = vmatprep.subr.mxu0 0.0
  %664 = vmatpush1.msra.mxu0 0.0
  %665 = vmatprep.subr.mxu0 0.0
  %666 = vmatpush1.msra.mxu0 0.0
  %667 = vmatprep.subr.mxu0 0.0
  %668 = vmatpush1.msra.mxu0 0.0
  %669 = vmatprep.subr.mxu0 0.0
  %670 = vmatpush1.msra.mxu0 0.0
  %671 = vmatprep.subr.mxu0 0.0
  %672 = vmatpush1.msra.mxu0 0.0
  %673 = vmatprep.subr.mxu0 0.0
  %674 = vmatpush1.msra.mxu0 0.0
  %675 = vmatprep.subr.mxu0 0.0
  %676 = vmatpush1.msra.mxu0 0.0
  %677 = vmatprep.subr.mxu0 0.0
  %678 = vmatpush1.msra.mxu0 0.0
  %679 = vmatprep.subr.mxu0 0.0
  %680 = vmatpush1.msra.mxu0 0.0
  %681 = vmatprep.subr.mxu0 0.0
  %682 = vmatpush1.msra.mxu0 0.0
  %683 = vmatprep.subr.mxu0 0.0
  %684 = vmatpush1.msra.mxu0 0.0
  %685 = vmatprep.subr.mxu0 0.0
  %686 = vmatpush1.msra.mxu0 0.0
  %687 = vmatprep.subr.mxu0 0.0
  %688 = vmatpush1.msra.mxu0 0.0
  %689 = vmatprep.subr.mxu0 0.0
  %690 = vmatpush1.msra.mxu0 0.0
  %691 = vmatprep.subr.mxu0 0.0
  %692 = vmatpush1.msra.mxu0 0.0
  %693 = vmatprep.subr.mxu0 0.0
  %694 = vmatpush1.msra.mxu0 0.0
  %695 = vmatprep.subr.mxu0 0.0
  %696 = vmatpush1.msra.mxu0 0.0
  %697 = vmatprep.subr.mxu0 0.0
  %698 = vmatpush1.msra.mxu0 0.0
  %699 = vmatprep.mubr.f32.mxu0 0.0
  %700 = vmatmul.mubr.f32.gmra.mrb[0].mxu0 %v630
  %v701 = vpop.f32.mrb[0].mxu0
  %v702 = vadd.f32 %v621, %v701
  %v703 = vpop.f32.mrb[0].mxu0
  %704 = vmatprep.mubr.f32.mxu0 0.0
  %705 = vmatmul.mubr.f32.gmra.mrb[0].mxu0 %v633
  %v706 = vpop.f32.mrb[0].mxu0
  %v707 = vadd.f32 %v626, %v706
  %v708 = vpop.f32.mrb[0].mxu0
  %709 = vdwg.mxu0
  %710 = vrot.lane.b32.xlu0 %v136, 112
  %v711 = vpop.permute.xlu0 %710
  %712 = vrot.lane.b32.xlu0 %v141, 112
  %v713 = vpop.permute.xlu0 %712
  %714 = vrot.lane.b32.xlu0 %v136, 80
  %v715 = vpop.permute.xlu0 %714
  %716 = vrot.lane.b32.xlu0 %v141, 80
  %v717 = vpop.permute.xlu0 %716
  %v718 = vsel %vm154, %v711, 0
  %v720 = vsel %vm154, %v713, 0
  %v722 = vsel %vm154, %v715, 0
  %v724 = vsel %vm154, %v717, 0
  %726 = vmatprep.subr.mxu0 0.0
  %727 = vmatpush1.xpose.msra.mxu0 %v722
  %728 = vmatprep.subr.mxu0 0.0
  %729 = vmatpush1.xpose.msra.mxu0 %v724
  %730 = vmatprep.subr.mxu0 0.0
  %731 = vmatpush1.xpose.msra.mxu0 0.0
  %732 = vmatprep.subr.mxu0 0.0
  %733 = vmatpush1.xpose.msra.mxu0 0.0
  %734 = vmatprep.subr.mxu0 0.0
  %735 = vmatpush1.xpose.msra.mxu0 0.0
  %736 = vmatprep.subr.mxu0 0.0
  %737 = vmatpush1.xpose.msra.mxu0 0.0
  %738 = vmatprep.subr.mxu0 0.0
  %739 = vmatpush1.xpose.msra.mxu0 0.0
  %740 = vmatprep.subr.mxu0 0.0
  %741 = vmatpush1.xpose.msra.mxu0 0.0
  %742 = vmatprep.subr.mxu0 0.0
  %743 = vmatpush1.xpose.msra.mxu0 0.0
  %744 = vmatprep.subr.mxu0 0.0
  %745 = vmatpush1.xpose.msra.mxu0 0.0
  %746 = vmatprep.subr.mxu0 0.0
  %747 = vmatpush1.xpose.msra.mxu0 0.0
  %748 = vmatprep.subr.mxu0 0.0
  %749 = vmatpush1.xpose.msra.mxu0 0.0
  %750 = vmatprep.subr.mxu0 0.0
  %751 = vmatpush1.xpose.msra.mxu0 0.0
  %752 = vmatprep.subr.mxu0 0.0
  %753 = vmatpush1.xpose.msra.mxu0 0.0
  %754 = vmatprep.subr.mxu0 0.0
  %755 = vmatpush1.xpose.msra.mxu0 0.0
  %756 = vmatprep.subr.mxu0 0.0
  %757 = vmatpush1.xpose.msra.mxu0 0.0
  %758 = vmatprep.subr.mxu0 0.0
  %759 = vmatpush1.xpose.msra.mxu0 0.0
  %760 = vmatprep.subr.mxu0 0.0
  %761 = vmatpush1.xpose.msra.mxu0 0.0
  %762 = vmatprep.subr.mxu0 0.0
  %763 = vmatpush1.xpose.msra.mxu0 0.0
  %764 = vmatprep.subr.mxu0 0.0
  %765 = vmatpush1.xpose.msra.mxu0 0.0
  %766 = vmatprep.subr.mxu0 0.0
  %767 = vmatpush1.xpose.msra.mxu0 0.0
  %768 = vmatprep.subr.mxu0 0.0
  %769 = vmatpush1.xpose.msra.mxu0 0.0
  %770 = vmatprep.subr.mxu0 0.0
  %771 = vmatpush1.xpose.msra.mxu0 0.0
  %772 = vmatprep.subr.mxu0 0.0
  %773 = vmatpush1.xpose.msra.mxu0 0.0
  %774 = vmatprep.subr.mxu0 0.0
  %775 = vmatpush1.xpose.msra.mxu0 0.0
  %776 = vmatprep.subr.mxu0 0.0
  %777 = vmatpush1.xpose.msra.mxu0 0.0
  %778 = vmatprep.subr.mxu0 0.0
  %779 = vmatpush1.xpose.msra.mxu0 0.0
  %780 = vmatprep.subr.mxu0 0.0
  %781 = vmatpush1.xpose.msra.mxu0 0.0
  %782 = vmatprep.subr.mxu0 0.0
  %783 = vmatpush1.xpose.msra.mxu0 0.0
  %784 = vmatprep.subr.mxu0 0.0
  %785 = vmatpush1.xpose.msra.mxu0 0.0
  %786 = vmatprep.subr.mxu0 0.0
  %787 = vmatpush1.xpose.msra.mxu0 0.0
  %788 = vmatprep.subr.mxu0 0.0
  %789 = vmatpush1.xpose.msra.mxu0 0.0
  %790 = vmatprep.mubr.f32.mxu0 0.0
  %791 = vmatmul.mubr.f32.gmra.mrb[0].mxu0 %v718
  %v792 = vpop.f32.mrb[0].mxu0
  %v793 = vadd.f32 %v49, %v792
  %v794 = vpop.f32.mrb[0].mxu0
  %795 = vmatprep.mubr.f32.mxu0 0.0
  %796 = vmatmul.mubr.f32.gmra.mrb[0].mxu0 %v720
  %v797 = vpop.f32.mrb[0].mxu0
  %v798 = vadd.f32 %v50, %v797
  %v799 = vpop.f32.mrb[0].mxu0
  %800 = vdwg.mxu0
  %v801 = vsel %vm238, %v793, -inf
  %802 = vmax.xlane.f32.xlu0 %v801
  %v803 = vpop.xlane.xlu0 %802
  %v804 = vsel %vm238, %v798, -inf
  %805 = vmax.xlane.f32.xlu0 %v804
  %v806 = vpop.xlane.xlu0 %805
  %v807 = vsub.f32 %v793, %v803
  %v808 = vsub.f32 %v798, %v806
  %v809 = vmul.f32 %v807, 1.442695
  %v810 = vpow.pop %v809
  %v811 = vmul.f32 %v808, 1.442695
  %v812 = vpow.pop %v811
  %v813 = vsel %vm238, %v810, 0.0
  %814 = vadd.xlane.f32.xlu0 %v813
  %v815 = vpop.xlane.xlu0 %814
  %v816 = vsel %vm238, %v812, 0.0
  %817 = vadd.xlane.f32.xlu0 %v816
  %v818 = vpop.xlane.xlu0 %817
  %v819 = vrcp.pop %v815
  %v820 = vrcp.pop %v818
  %v821 = vmul.f32 %v810, %v819
  %v822 = vmul.f32 %v812, %v820
  %823 = vrot.lane.b32.xlu0 %v136, 48
  %v824 = vpop.permute.xlu0 %823
  %825 = vrot.lane.b32.xlu0 %v141, 48
  %v826 = vpop.permute.xlu0 %825
  %v830 = vsel %vm238, %v821, 0
  %v833 = vsel %vm238, %v822, 0
  %835 = vmatprep.subr.mxu0 0.0
  %836 = vmatpush1.msra.mxu0 %v824
  %837 = vmatprep.subr.mxu0 0.0
  %838 = vmatpush1.msra.mxu0 %v826
  %839 = vmatprep.subr.mxu0 0.0
  %840 = vmatpush1.msra.mxu0 0.0
  %841 = vmatprep.subr.mxu0 0.0
  %842 = vmatpush1.msra.mxu0 0.0
  %843 = vmatprep.subr.mxu0 0.0
  %844 = vmatpush1.msra.mxu0 0.0
  %845 = vmatprep.subr.mxu0 0.0
  %846 = vmatpush1.msra.mxu0 0.0
  %847 = vmatprep.subr.mxu0 0.0
  %848 = vmatpush1.msra.mxu0 0.0
  %849 = vmatprep.subr.mxu0 0.0
  %850 = vmatpush1.msra.mxu0 0.0
  %851 = vmatprep.subr.mxu0 0.0
  %852 = vmatpush1.msra.mxu0 0.0
  %853 = vmatprep.subr.mxu0 0.0
  %854 = vmatpush1.msra.mxu0 0.0
  %855 = vmatprep.subr.mxu0 0.0
  %856 = vmatpush1.msra.mxu0 0.0
  %857 = vmatprep.subr.mxu0 0.0
  %858 = vmatpush1.msra.mxu0 0.0
  %859 = vmatprep.subr.mxu0 0.0
  %860 = vmatpush1.msra.mxu0 0.0
  %861 = vmatprep.subr.mxu0 0.0
  %862 = vmatpush1.msra.mxu0 0.0
  %863 = vmatprep.subr.mxu0 0.0
  %864 = vmatpush1.msra.mxu0 0.0
  %865 = vmatprep.subr.mxu0 0.0
  %866 = vmatpush1.msra.mxu0 0.0
  %867 = vmatprep.subr.mxu0 0.0
  %868 = vmatpush1.msra.mxu0 0.0
  %869 = vmatprep.subr.mxu0 0.0
  %870 = vmatpush1.msra.mxu0 0.0
  %871 = vmatprep.subr.mxu0 0.0
  %872 = vmatpush1.msra.mxu0 0.0
  %873 = vmatprep.subr.mxu0 0.0
  %874 = vmatpush1.msra.mxu0 0.0
  %875 = vmatprep.subr.mxu0 0.0
  %876 = vmatpush1.msra.mxu0 0.0
  %877 = vmatprep.subr.mxu0 0.0
  %878 = vmatpush1.msra.mxu0 0.0
  %879 = vmatprep.subr.mxu0 0.0
  %880 = vmatpush1.msra.mxu0 0.0
  %881 = vmatprep.subr.mxu0 0.0
  %882 = vmatpush1.msra.mxu0 0.0
  %883 = vmatprep.subr.mxu0 0.0
  %884 = vmatpush1.msra.mxu0 0.0
  %885 = vmatprep.subr.mxu0 0.0
  %886 = vmatpush1.msra.mxu0 0.0
  %887 = vmatprep.subr.mxu0 0.0
  %888 = vmatpush1.msra.mxu0 0.0
  %889 = vmatprep.subr.mxu0 0.0
  %890 = vmatpush1.msra.mxu0 0.0
  %891 = vmatprep.subr.mxu0 0.0
  %892 = vmatpush1.msra.mxu0 0.0
  %893 = vmatprep.subr.mxu0 0.0
  %894 = vmatpush1.msra.mxu0 0.0
  %895 = vmatprep.subr.mxu0 0.0
  %896 = vmatpush1.msra.mxu0 0.0
  %897 = vmatprep.subr.mxu0 0.0
  %898 = vmatpush1.msra.mxu0 0.0
  %899 = vmatprep.mubr.f32.mxu0 0.0
  %900 = vmatmul.mubr.f32.gmra.mrb[0].mxu0 %v830
  %v901 = vpop.f32.mrb[0].mxu0
  %v902 = vadd.f32 0.0, %v901
  %v903 = vpop.f32.mrb[0].mxu0
  %904 = vmatprep.mubr.f32.mxu0 0.0
  %905 = vmatmul.mubr.f32.gmra.mrb[0].mxu0 %v833
  %v906 = vpop.f32.mrb[0].mxu0
  %v907 = vadd.f32 0.0, %v906
  %v908 = vpop.f32.mrb[0].mxu0
  %909 = vdwg.mxu0
  %v911 = vsel %vm154, %v902, 0
  %v914 = vsel %vm154, %v907, 0
  %916 = vmatprep.subr.mxu0 0.0
  %917 = vmatpush1.msra.mxu0 %v146
  %918 = vmatprep.subr.mxu0 0.0
  %919 = vmatpush1.msra.mxu0 0.0
  %920 = vmatprep.subr.mxu0 0.0
  %921 = vmatpush1.msra.mxu0 0.0
  %922 = vmatprep.subr.mxu0 0.0
  %923 = vmatpush1.msra.mxu0 0.0
  %924 = vmatprep.subr.mxu0 0.0
  %925 = vmatpush1.msra.mxu0 0.0
  %926 = vmatprep.subr.mxu0 0.0
  %927 = vmatpush1.msra.mxu0 0.0
  %928 = vmatprep.subr.mxu0 0.0
  %929 = vmatpush1.msra.mxu0 0.0
  %930 = vmatprep.subr.mxu0 0.0
  %931 = vmatpush1.msra.mxu0 0.0
  %932 = vmatprep.subr.mxu0 0.0
  %933 = vmatpush1.msra.mxu0 0.0
  %934 = vmatprep.subr.mxu0 0.0
  %935 = vmatpush1.msra.mxu0 0.0
  %936 = vmatprep.subr.mxu0 0.0
  %937 = vmatpush1.msra.mxu0 0.0
  %938 = vmatprep.subr.mxu0 0.0
  %939 = vmatpush1.msra.mxu0 0.0
  %940 = vmatprep.subr.mxu0 0.0
  %941 = vmatpush1.msra.mxu0 0.0
  %942 = vmatprep.subr.mxu0 0.0
  %943 = vmatpush1.msra.mxu0 0.0
  %944 = vmatprep.subr.mxu0 0.0
  %945 = vmatpush1.msra.mxu0 0.0
  %946 = vmatprep.subr.mxu0 0.0
  %947 = vmatpush1.msra.mxu0 0.0
  %948 = vmatprep.subr.mxu0 0.0
  %949 = vmatpush1.msra.mxu0 0.0
  %950 = vmatprep.subr.mxu0 0.0
  %951 = vmatpush1.msra.mxu0 0.0
  %952 = vmatprep.subr.mxu0 0.0
  %953 = vmatpush1.msra.mxu0 0.0
  %954 = vmatprep.subr.mxu0 0.0
  %955 = vmatpush1.msra.mxu0 0.0
  %956 = vmatprep.subr.mxu0 0.0
  %957 = vmatpush1.msra.mxu0 0.0
  %958 = vmatprep.subr.mxu0 0.0
  %959 = vmatpush1.msra.mxu0 0.0
  %960 = vmatprep.subr.mxu0 0.0
  %961 = vmatpush1.msra.mxu0 0.0
  %962 = vmatprep.subr.mxu0 0.0
  %963 = vmatpush1.msra.mxu0 0.0
  %964 = vmatprep.subr.mxu0 0.0
  %965 = vmatpush1.msra.mxu0 0.0
  %966 = vmatprep.subr.mxu0 0.0
  %967 = vmatpush1.msra.mxu0 0.0
  %968 = vmatprep.subr.mxu0 0.0
  %969 = vmatpush1.msra.mxu0 0.0
  %970 = vmatprep.subr.mxu0 0.0
  %971 = vmatpush1.msra.mxu0 0.0
  %972 = vmatprep.subr.mxu0 0.0
  %973 = vmatpush1.msra.mxu0 0.0
  %974 = vmatprep.subr.mxu0 0.0
  %975 = vmatpush1.msra.mxu0 0.0
  %976 = vmatprep.subr.mxu0 0.0
  %977 = vmatpush1.msra.mxu0 0.0
  %978 = vmatprep.subr.mxu0 0.0
  %979 = vmatpush1.msra.mxu0 0.0
  %980 = vmatprep.mubr.f32.mxu0 0.0
  %981 = vmatmul.mubr.f32.gmra.mrb[0].mxu0 %v911
  %v982 = vpop.f32.mrb[0].mxu0
  %v983 = vadd.f32 0.0, %v982
  %v984 = vpop.f32.mrb[0].mxu0
  %985 = vmatprep.mubr.f32.mxu0 0.0
  %986 = vmatmul.mubr.f32.gmra.mrb[0].mxu0 %v914
  %v987 = vpop.f32.mrb[0].mxu0
  %v988 = vadd.f32 0.0, %v987
  %v989 = vpop.f32.mrb[0].mxu0
  %990 = vdwg.mxu0
  %v991 = vadd.f32 %v702, %v983
  %v992 = vadd.f32 %v707, %v988
  %993 = vrot.lane.b32.xlu0 %v136, 104
  %v994 = vpop.permute.xlu0 %993
  %995 = vrot.lane.b32.xlu0 %v141, 104
  %v996 = vpop.permute.xlu0 %995
  %997 = vrot.lane.b32.xlu0 %v136, 72
  %v998 = vpop.permute.xlu0 %997
  %999 = vrot.lane.b32.xlu0 %v141, 72
  %v1000 = vpop.permute.xlu0 %999
  %v1001 = vsel %vm154, %v994, 0
  %v1003 = vsel %vm154, %v996, 0
  %v1005 = vsel %vm154, %v998, 0
  %v1007 = vsel %vm154, %v1000, 0
  %1009 = vmatprep.subr.mxu0 0.0
  %1010 = vmatpush1.xpose.msra.mxu0 %v1005
  %1011 = vmatprep.subr.mxu0 0.0
  %1012 = vmatpush1.xpose.msra.mxu0 %v1007
  %1013 = vmatprep.subr.mxu0 0.0
  %1014 = vmatpush1.xpose.msra.mxu0 0.0
  %1015 = vmatprep.subr.mxu0 0.0
  %1016 = vmatpush1.xpose.msra.mxu0 0.0
  %1017 = vmatprep.subr.mxu0 0.0
  %1018 = vmatpush1.xpose.msra.mxu0 0.0
  %1019 = vmatprep.subr.mxu0 0.0
  %1020 = vmatpush1.xpose.msra.mxu0 0.0
  %1021 = vmatprep.subr.mxu0 0.0
  %1022 = vmatpush1.xpose.msra.mxu0 0.0
  %1023 = vmatprep.subr.mxu0 0.0
  %1024 = vmatpush1.xpose.msra.mxu0 0.0
  %1025 = vmatprep.subr.mxu0 0.0
  %1026 = vmatpush1.xpose.msra.mxu0 0.0
  %1027 = vmatprep.subr.mxu0 0.0
  %1028 = vmatpush1.xpose.msra.mxu0 0.0
  %1029 = vmatprep.subr.mxu0 0.0
  %1030 = vmatpush1.xpose.msra.mxu0 0.0
  %1031 = vmatprep.subr.mxu0 0.0
  %1032 = vmatpush1.xpose.msra.mxu0 0.0
  %1033 = vmatprep.subr.mxu0 0.0
  %1034 = vmatpush1.xpose.msra.mxu0 0.0
  %1035 = vmatprep.subr.mxu0 0.0
  %1036 = vmatpush1.xpose.msra.mxu0 0.0
  %1037 = vmatprep.subr.mxu0 0.0
  %1038 = vmatpush1.xpose.msra.mxu0 0.0
  %1039 = vmatprep.subr.mxu0 0.0
  %1040 = vmatpush1.xpose.msra.mxu0 0.0
  %1041 = vmatprep.subr.mxu0 0.0
  %1042 = vmatpush1.xpose.msra.mxu0 0.0
  %1043 = vmatprep.subr.mxu0 0.0
  %1044 = vmatpush1.xpose.msra.mxu0 0.0
  %1045 = vmatprep.subr.mxu0 0.0
  %1046 = vmatpush1.xpose.msra.mxu0 0.0
  %1047 = vmatprep.subr.mxu0 0.0
  %1048 = vmatpush1.xpose.msra.mxu0 0.0
  %1049 = vmatprep.subr.mxu0 0.0
  %1050 = vmatpush1.xpose.msra.mxu0 0.0
  %1051 = vmatprep.subr.mxu0 0.0
  %1052 = vmatpush1.xpose.msra.mxu0 0.0
  %1053 = vmatprep.subr.mxu0 0.0
  %1054 = vmatpush1.xpose.msra.mxu0 0.0
  %1055 = vmatprep.subr.mxu0 0.0
  %1056 = vmatpush1.xpose.msra.mxu0 0.0
  %1057 = vmatprep.subr.mxu0 0.0
  %1058 = vmatpush1.xpose.msra.mxu0 0.0
  %1059 = vmatprep.subr.mxu0 0.0
  %1060 = vmatpush1.xpose.msra.mxu0 0.0
  %1061 = vmatprep.subr.mxu0 0.0
  %1062 = vmatpush1.xpose.msra.mxu0 0.0
  %1063 = vmatprep.subr.mxu0 0.0
  %1064 = vmatpush1.xpose.msra.mxu0 0.0
  %1065 = vmatprep.subr.mxu0 0.0
  %1066 = vmatpush1.xpose.msra.mxu0 0.0
  %1067 = vmatprep.subr.mxu0 0.0
  %1068 = vmatpush1.xpose.msra.mxu0 0.0
  %1069 = vmatprep.subr.mxu0 0.0
  %1070 = vmatpush1.xpose.msra.mxu0 0.0
  %1071 = vmatprep.subr.mxu0 0.0
  %1072 = vmatpush1.xpose.msra.mxu0 0.0
  %1073 = vmatprep.mubr.f32.mxu0 0.0
  %1074 = vmatmul.mubr.f32.gmra.mrb[0].mxu0 %v1001
  %v1075 = vpop.f32.mrb[0].mxu0
  %v1076 = vadd.f32 %v49, %v1075
  %v1077 = vpop.f32.mrb[0].mxu0
  %1078 = vmatprep.mubr.f32.mxu0 0.0
  %1079 = vmatmul.mubr.f32.gmra.mrb[0].mxu0 %v1003
  %v1080 = vpop.f32.mrb[0].mxu0
  %v1081 = vadd.f32 %v50, %v1080
  %v1082 = vpop.f32.mrb[0].mxu0
  %1083 = vdwg.mxu0
  %v1084 = vsel %vm238, %v1076, -inf
  %1085 = vmax.xlane.f32.xlu0 %v1084
  %v1086 = vpop.xlane.xlu0 %1085
  %v1087 = vsel %vm238, %v1081, -inf
  %1088 = vmax.xlane.f32.xlu0 %v1087
  %v1089 = vpop.xlane.xlu0 %1088
  %v1090 = vsub.f32 %v1076, %v1086
  %v1091 = vsub.f32 %v1081, %v1089
  %v1092 = vmul.f32 %v1090, 1.442695
  %v1093 = vpow.pop %v1092
  %v1094 = vmul.f32 %v1091, 1.442695
  %v1095 = vpow.pop %v1094
  %v1096 = vsel %vm238, %v1093, 0.0
  %1097 = vadd.xlane.f32.xlu0 %v1096
  %v1098 = vpop.xlane.xlu0 %1097
  %v1099 = vsel %vm238, %v1095, 0.0
  %1100 = vadd.xlane.f32.xlu0 %v1099
  %v1101 = vpop.xlane.xlu0 %1100
  %v1102 = vrcp.pop %v1098
  %v1103 = vrcp.pop %v1101
  %v1104 = vmul.f32 %v1093, %v1102
  %v1105 = vmul.f32 %v1095, %v1103
  %1106 = vrot.lane.b32.xlu0 %v136, 40
  %v1107 = vpop.permute.xlu0 %1106
  %1108 = vrot.lane.b32.xlu0 %v141, 40
  %v1109 = vpop.permute.xlu0 %1108
  %v1113 = vsel %vm238, %v1104, 0
  %v1116 = vsel %vm238, %v1105, 0
  %1118 = vmatprep.subr.mxu0 0.0
  %1119 = vmatpush1.msra.mxu0 %v1107
  %1120 = vmatprep.subr.mxu0 0.0
  %1121 = vmatpush1.msra.mxu0 %v1109
  %1122 = vmatprep.subr.mxu0 0.0
  %1123 = vmatpush1.msra.mxu0 0.0
  %1124 = vmatprep.subr.mxu0 0.0
  %1125 = vmatpush1.msra.mxu0 0.0
  %1126 = vmatprep.subr.mxu0 0.0
  %1127 = vmatpush1.msra.mxu0 0.0
  %1128 = vmatprep.subr.mxu0 0.0
  %1129 = vmatpush1.msra.mxu0 0.0
  %1130 = vmatprep.subr.mxu0 0.0
  %1131 = vmatpush1.msra.mxu0 0.0
  %1132 = vmatprep.subr.mxu0 0.0
  %1133 = vmatpush1.msra.mxu0 0.0
  %1134 = vmatprep.subr.mxu0 0.0
  %1135 = vmatpush1.msra.mxu0 0.0
  %1136 = vmatprep.subr.mxu0 0.0
  %1137 = vmatpush1.msra.mxu0 0.0
  %1138 = vmatprep.subr.mxu0 0.0
  %1139 = vmatpush1.msra.mxu0 0.0
  %1140 = vmatprep.subr.mxu0 0.0
  %1141 = vmatpush1.msra.mxu0 0.0
  %1142 = vmatprep.subr.mxu0 0.0
  %1143 = vmatpush1.msra.mxu0 0.0
  %1144 = vmatprep.subr.mxu0 0.0
  %1145 = vmatpush1.msra.mxu0 0.0
  %1146 = vmatprep.subr.mxu0 0.0
  %1147 = vmatpush1.msra.mxu0 0.0
  %1148 = vmatprep.subr.mxu0 0.0
  %1149 = vmatpush1.msra.mxu0 0.0
  %1150 = vmatprep.subr.mxu0 0.0
  %1151 = vmatpush1.msra.mxu0 0.0
  %1152 = vmatprep.subr.mxu0 0.0
  %1153 = vmatpush1.msra.mxu0 0.0
  %1154 = vmatprep.subr.mxu0 0.0
  %1155 = vmatpush1.msra.mxu0 0.0
  %1156 = vmatprep.subr.mxu0 0.0
  %1157 = vmatpush1.msra.mxu0 0.0
  %1158 = vmatprep.subr.mxu0 0.0
  %1159 = vmatpush1.msra.mxu0 0.0
  %1160 = vmatprep.subr.mxu0 0.0
  %1161 = vmatpush1.msra.mxu0 0.0
  %1162 = vmatprep.subr.mxu0 0.0
  %1163 = vmatpush1.msra.mxu0 0.0
  %1164 = vmatprep.subr.mxu0 0.0
  %1165 = vmatpush1.msra.mxu0 0.0
  %1166 = vmatprep.subr.mxu0 0.0
  %1167 = vmatpush1.msra.mxu0 0.0
  %1168 = vmatprep.subr.mxu0 0.0
  %1169 = vmatpush1.msra.mxu0 0.0
  %1170 = vmatprep.subr.mxu0 0.0
  %1171 = vmatpush1.msra.mxu0 0.0
  %1172 = vmatprep.subr.mxu0 0.0
  %1173 = vmatpush1.msra.mxu0 0.0
  %1174 = vmatprep.subr.mxu0 0.0
  %1175 = vmatpush1.msra.mxu0 0.0
  %1176 = vmatprep.subr.mxu0 0.0
  %1177 = vmatpush1.msra.mxu0 0.0
  %1178 = vmatprep.subr.mxu0 0.0
  %1179 = vmatpush1.msra.mxu0 0.0
  %1180 = vmatprep.subr.mxu0 0.0
  %1181 = vmatpush1.msra.mxu0 0.0
  %1182 = vmatprep.mubr.f32.mxu0 0.0
  %1183 = vmatmul.mubr.f32.gmra.mrb[0].mxu0 %v1113
  %v1184 = vpop.f32.mrb[0].mxu0
  %v1185 = vadd.f32 0.0, %v1184
  %v1186 = vpop.f32.mrb[0].mxu0
  %1187 = vmatprep.mubr.f32.mxu0 0.0
  %1188 = vmatmul.mubr.f32.gmra.mrb[0].mxu0 %v1116
  %v1189 = vpop.f32.mrb[0].mxu0
  %v1190 = vadd.f32 0.0, %v1189
  %v1191 = vpop.f32.mrb[0].mxu0
  %1192 = vdwg.mxu0
  %v1194 = vsel %vm154, %v1185, 0
  %v1197 = vsel %vm154, %v1190, 0
  %1199 = vmatprep.subr.mxu0 0.0
  %1200 = vmatpush1.msra.mxu0 %v147
  %1201 = vmatprep.subr.mxu0 0.0
  %1202 = vmatpush1.msra.mxu0 0.0
  %1203 = vmatprep.subr.mxu0 0.0
  %1204 = vmatpush1.msra.mxu0 0.0
  %1205 = vmatprep.subr.mxu0 0.0
  %1206 = vmatpush1.msra.mxu0 0.0
  %1207 = vmatprep.subr.mxu0 0.0
  %1208 = vmatpush1.msra.mxu0 0.0
  %1209 = vmatprep.subr.mxu0 0.0
  %1210 = vmatpush1.msra.mxu0 0.0
  %1211 = vmatprep.subr.mxu0 0.0
  %1212 = vmatpush1.msra.mxu0 0.0
  %1213 = vmatprep.subr.mxu0 0.0
  %1214 = vmatpush1.msra.mxu0 0.0
  %1215 = vmatprep.subr.mxu0 0.0
  %1216 = vmatpush1.msra.mxu0 0.0
  %1217 = vmatprep.subr.mxu0 0.0
  %1218 = vmatpush1.msra.mxu0 0.0
  %1219 = vmatprep.subr.mxu0 0.0
  %1220 = vmatpush1.msra.mxu0 0.0
  %1221 = vmatprep.subr.mxu0 0.0
  %1222 = vmatpush1.msra.mxu0 0.0
  %1223 = vmatprep.subr.mxu0 0.0
  %1224 = vmatpush1.msra.mxu0 0.0
  %1225 = vmatprep.subr.mxu0 0.0
  %1226 = vmatpush1.msra.mxu0 0.0
  %1227 = vmatprep.subr.mxu0 0.0
  %1228 = vmatpush1.msra.mxu0 0.0
  %1229 = vmatprep.subr.mxu0 0.0
  %1230 = vmatpush1.msra.mxu0 0.0
  %1231 = vmatprep.subr.mxu0 0.0
  %1232 = vmatpush1.msra.mxu0 0.0
  %1233 = vmatprep.subr.mxu0 0.0
  %1234 = vmatpush1.msra.mxu0 0.0
  %1235 = vmatprep.subr.mxu0 0.0
  %1236 = vmatpush1.msra.mxu0 0.0
  %1237 = vmatprep.subr.mxu0 0.0
  %1238 = vmatpush1.msra.mxu0 0.0
  %1239 = vmatprep.subr.mxu0 0.0
  %1240 = vmatpush1.msra.mxu0 0.0
  %1241 = vmatprep.subr.mxu0 0.0
  %1242 = vmatpush1.msra.mxu0 0.0
  %1243 = vmatprep.subr.mxu0 0.0
  %1244 = vmatpush1.msra.mxu0 0.0
  %1245 = vmatprep.subr.mxu0 0.0
  %1246 = vmatpush1.msra.mxu0 0.0
  %1247 = vmatprep.subr.mxu0 0.0
  %1248 = vmatpush1.msra.mxu0 0.0
  %1249 = vmatprep.subr.mxu0 0.0
  %1250 = vmatpush1.msra.mxu0 0.0
  %1251 = vmatprep.subr.mxu0 0.0
  %1252 = vmatpush1.msra.mxu0 0.0
  %1253 = vmatprep.subr.mxu0 0.0
  %1254 = vmatpush1.msra.mxu0 0.0
  %1255 = vmatprep.subr.mxu0 0.0
  %1256 = vmatpush1.msra.mxu0 0.0
  %1257 = vmatprep.subr.mxu0 0.0
  %1258 = vmatpush1.msra.mxu0 0.0
  %1259 = vmatprep.subr.mxu0 0.0
  %1260 = vmatpush1.msra.mxu0 0.0
  %1261 = vmatprep.subr.mxu0 0.0
  %1262 = vmatpush1.msra.mxu0 0.0
  %1263 = vmatprep.mubr.f32.mxu0 0.0
  %1264 = vmatmul.mubr.f32.gmra.mrb[0].mxu0 %v1194
  %v1265 = vpop.f32.mrb[0].mxu0
  %v1266 = vadd.f32 0.0, %v1265
  %v1267 = vpop.f32.mrb[0].mxu0
  %1268 = vmatprep.mubr.f32.mxu0 0.0
  %1269 = vmatmul.mubr.f32.gmra.mrb[0].mxu0 %v1197
  %v1270 = vpop.f32.mrb[0].mxu0
  %v1271 = vadd.f32 0.0, %v1270
  %v1272 = vpop.f32.mrb[0].mxu0
  %1273 = vdwg.mxu0
  %v1274 = vadd.f32 %v991, %v1266
  %v1275 = vadd.f32 %v992, %v1271
  %v1276 = vld [vmem:[%s5] sm:$0x1]
  %v1278 = vlaneseq
  %v1279 = vshrl.u32 %v1278, 7
  %v1280 = vsub.s32 0, %v1279
  %v1281 = vrot.slane %v1276, %v1280
  %v1283 = vadd.f32 %v1274, %v1281
  %v1284 = vadd.f32 %v1275, %v1281
  %v1285 = vadd.f32 %v47, %v1283
  %v1286 = vadd.f32 %v48, %v1284
  %v1287 = vld [vmem:[%s10] sm:$0x1]
  %v1288 = vld [vmem:[%s11] sm:$0x1]
  %v1289 = vsel %vm62, %v1285, 0.0
  %1290 = vadd.xlane.f32.xlu0 %v1289
  %v1291 = vpop.xlane.xlu0 %1290
  %v1292 = vsel %vm62, %v1286, 0.0
  %1293 = vadd.xlane.f32.xlu0 %v1292
  %v1294 = vpop.xlane.xlu0 %1293
  %v1295 = vrcp.pop 32.0
  %v1296 = vmul.f32 %v1291, %v1295
  %v1297 = vmul.f32 %v1294, %v1295
  %v1298 = vsub.f32 %v1285, %v1296
  %v1299 = vsub.f32 %v1286, %v1297
  %v1300 = vmul.f32 %v1298, %v1298
  %v1301 = vmul.f32 %v1299, %v1299
  %v1302 = vsel %vm62, %v1300, 0.0
  %1303 = vadd.xlane.f32.xlu0 %v1302
  %v1304 = vpop.xlane.xlu0 %1303
  %v1305 = vsel %vm62, %v1301, 0.0
  %1306 = vadd.xlane.f32.xlu0 %v1305
  %v1307 = vpop.xlane.xlu0 %1306
  %v1308 = vmul.f32 %v1304, %v1295
  %v1309 = vmul.f32 %v1307, %v1295
  %v1310 = vadd.f32 %v1308, 1e-05
  %v1311 = vadd.f32 %v1309, 1e-05
  %v1312 = vrsqrt.pop %v1310
  %v1313 = vrsqrt.pop %v1311
  %v1314 = vmul.f32 %v1298, %v1312
  %v1315 = vmul.f32 %v1299, %v1313
  %v1317 = vlaneseq
  %v1318 = vshrl.u32 %v1317, 7
  %v1319 = vsub.s32 0, %v1318
  %v1320 = vrot.slane %v1287, %v1319
  %v1322 = vmul.f32 %v1314, %v1320
  %v1323 = vmul.f32 %v1315, %v1320
  %v1325 = vlaneseq
  %v1326 = vshrl.u32 %v1325, 7
  %v1327 = vsub.s32 0, %v1326
  %v1328 = vrot.slane %v1288, %v1327
  %v1330 = vadd.f32 %v1322, %v1328
  %v1331 = vadd.f32 %v1323, %v1328
  %v1332 = vld [vmem:[%s6] sm:$0xff]
  %v1333 = vld [vmem:[%s6 + $0x8] sm:$0xff]
  %v1334 = vld [vmem:[%s6 + $0x10] sm:$0xff]
  %v1335 = vld [vmem:[%s6 + $0x18] sm:$0xff]
  %v1336 = vld [vmem:[%s7] sm:$0x1]
  %v1338 = vlaneseq
  %v1339 = vshrl.u32 %v1338, 7
  %v1340 = vsub.s32 0, %v1339
  %v1341 = vrot.slane %v1336, %v1340
  %v1344 = vsel %vm62, %v1330, 0
  %v1347 = vsel %vm62, %v1331, 0
  %1349 = vmatprep.subr.mxu0 0.0
  %1350 = vmatpush1.msra.mxu0 %v1332
  %1351 = vmatprep.subr.mxu0 0.0
  %1352 = vmatpush1.msra.mxu0 %v1333
  %1353 = vmatprep.subr.mxu0 0.0
  %1354 = vmatpush1.msra.mxu0 %v1334
  %1355 = vmatprep.subr.mxu0 0.0
  %1356 = vmatpush1.msra.mxu0 %v1335
  %1357 = vmatprep.subr.mxu0 0.0
  %1358 = vmatpush1.msra.mxu0 0.0
  %1359 = vmatprep.subr.mxu0 0.0
  %1360 = vmatpush1.msra.mxu0 0.0
  %1361 = vmatprep.subr.mxu0 0.0
  %1362 = vmatpush1.msra.mxu0 0.0
  %1363 = vmatprep.subr.mxu0 0.0
  %1364 = vmatpush1.msra.mxu0 0.0
  %1365 = vmatprep.subr.mxu0 0.0
  %1366 = vmatpush1.msra.mxu0 0.0
  %1367 = vmatprep.subr.mxu0 0.0
  %1368 = vmatpush1.msra.mxu0 0.0
  %1369 = vmatprep.subr.mxu0 0.0
  %1370 = vmatpush1.msra.mxu0 0.0
  %1371 = vmatprep.subr.mxu0 0.0
  %1372 = vmatpush1.msra.mxu0 0.0
  %1373 = vmatprep.subr.mxu0 0.0
  %1374 = vmatpush1.msra.mxu0 0.0
  %1375 = vmatprep.subr.mxu0 0.0
  %1376 = vmatpush1.msra.mxu0 0.0
  %1377 = vmatprep.subr.mxu0 0.0
  %1378 = vmatpush1.msra.mxu0 0.0
  %1379 = vmatprep.subr.mxu0 0.0
  %1380 = vmatpush1.msra.mxu0 0.0
  %1381 = vmatprep.subr.mxu0 0.0
  %1382 = vmatpush1.msra.mxu0 0.0
  %1383 = vmatprep.subr.mxu0 0.0
  %1384 = vmatpush1.msra.mxu0 0.0
  %1385 = vmatprep.subr.mxu0 0.0
  %1386 = vmatpush1.msra.mxu0 0.0
  %1387 = vmatprep.subr.mxu0 0.0
  %1388 = vmatpush1.msra.mxu0 0.0
  %1389 = vmatprep.subr.mxu0 0.0
  %1390 = vmatpush1.msra.mxu0 0.0
  %1391 = vmatprep.subr.mxu0 0.0
  %1392 = vmatpush1.msra.mxu0 0.0
  %1393 = vmatprep.subr.mxu0 0.0
  %1394 = vmatpush1.msra.mxu0 0.0
  %1395 = vmatprep.subr.mxu0 0.0
  %1396 = vmatpush1.msra.mxu0 0.0
  %1397 = vmatprep.subr.mxu0 0.0
  %1398 = vmatpush1.msra.mxu0 0.0
  %1399 = vmatprep.subr.mxu0 0.0
  %1400 = vmatpush1.msra.mxu0 0.0
  %1401 = vmatprep.subr.mxu0 0.0
  %1402 = vmatpush1.msra.mxu0 0.0
  %1403 = vmatprep.subr.mxu0 0.0
  %1404 = vmatpush1.msra.mxu0 0.0
  %1405 = vmatprep.subr.mxu0 0.0
  %1406 = vmatpush1.msra.mxu0 0.0
  %1407 = vmatprep.subr.mxu0 0.0
  %1408 = vmatpush1.msra.mxu0 0.0
  %1409 = vmatprep.subr.mxu0 0.0
  %1410 = vmatpush1.msra.mxu0 0.0
  %1411 = vmatprep.subr.mxu0 0.0
  %1412 = vmatpush1.msra.mxu0 0.0
  %1413 = vmatprep.mubr.f32.mxu0 0.0
  %1414 = vmatmul.mubr.f32.gmra.mrb[0].mxu0 %v1344
  %v1415 = vpop.f32.mrb[0].mxu0
  %v1416 = vadd.f32 %v1341, %v1415
  %v1417 = vpop.f32.mrb[0].mxu0
  %1418 = vmatprep.mubr.f32.mxu0 0.0
  %1419 = vmatmul.mubr.f32.gmra.mrb[0].mxu0 %v1347
  %v1420 = vpop.f32.mrb[0].mxu0
  %v1421 = vadd.f32 %v1341, %v1420
  %v1422 = vpop.f32.mrb[0].mxu0
  %1423 = vdwg.mxu0
  %v1424 = vmax.f32 %v1416, 0.0
  %v1425 = vmax.f32 %v1421, 0.0
  %v1426 = vld [vmem:[%s8] sm:$0xff]
  %v1427 = vld [vmem:[%s8 + $0x8] sm:$0xff]
  %v1428 = vld [vmem:[%s8 + $0x10] sm:$0xff]
  %v1429 = vld [vmem:[%s8 + $0x18] sm:$0xff]
  %v1430 = vld [vmem:[%s8 + $0x20] sm:$0xff]
  %v1431 = vld [vmem:[%s8 + $0x28] sm:$0xff]
  %v1432 = vld [vmem:[%s8 + $0x30] sm:$0xff]
  %v1433 = vld [vmem:[%s8 + $0x38] sm:$0xff]
  %v1434 = vld [vmem:[%s9] sm:$0x1]
  %v1436 = vlaneseq
  %v1437 = vshrl.u32 %v1436, 7
  %v1438 = vsub.s32 0, %v1437
  %v1439 = vrot.slane %v1434, %v1438
  %vm1441 = vcmask 523264
  %v1443 = vsel %vm1441, %v1424, 0
  %v1446 = vsel %vm1441, %v1425, 0
  %1448 = vmatprep.subr.mxu0 0.0
  %1449 = vmatpush1.msra.mxu0 %v1426
  %1450 = vmatprep.subr.mxu0 0.0
  %1451 = vmatpush1.msra.mxu0 %v1427
  %1452 = vmatprep.subr.mxu0 0.0
  %1453 = vmatpush1.msra.mxu0 %v1428
  %1454 = vmatprep.subr.mxu0 0.0
  %1455 = vmatpush1.msra.mxu0 %v1429
  %1456 = vmatprep.subr.mxu0 0.0
  %1457 = vmatpush1.msra.mxu0 %v1430
  %1458 = vmatprep.subr.mxu0 0.0
  %1459 = vmatpush1.msra.mxu0 %v1431
  %1460 = vmatprep.subr.mxu0 0.0
  %1461 = vmatpush1.msra.mxu0 %v1432
  %1462 = vmatprep.subr.mxu0 0.0
  %1463 = vmatpush1.msra.mxu0 %v1433
  %1464 = vmatprep.subr.mxu0 0.0
  %1465 = vmatpush1.msra.mxu0 0.0
  %1466 = vmatprep.subr.mxu0 0.0
  %1467 = vmatpush1.msra.mxu0 0.0
  %1468 = vmatprep.subr.mxu0 0.0
  %1469 = vmatpush1.msra.mxu0 0.0
  %1470 = vmatprep.subr.mxu0 0.0
  %1471 = vmatpush1.msra.mxu0 0.0
  %1472 = vmatprep.subr.mxu0 0.0
  %1473 = vmatpush1.msra.mxu0 0.0
  %1474 = vmatprep.subr.mxu0 0.0
  %1475 = vmatpush1.msra.mxu0 0.0
  %1476 = vmatprep.subr.mxu0 0.0
  %1477 = vmatpush1.msra.mxu0 0.0
  %1478 = vmatprep.subr.mxu0 0.0
  %1479 = vmatpush1.msra.mxu0 0.0
  %1480 = vmatprep.subr.mxu0 0.0
  %1481 = vmatpush1.msra.mxu0 0.0
  %1482 = vmatprep.subr.mxu0 0.0
  %1483 = vmatpush1.msra.mxu0 0.0
  %1484 = vmatprep.subr.mxu0 0.0
  %1485 = vmatpush1.msra.mxu0 0.0
  %1486 = vmatprep.subr.mxu0 0.0
  %1487 = vmatpush1.msra.mxu0 0.0
  %1488 = vmatprep.subr.mxu0 0.0
  %1489 = vmatpush1.msra.mxu0 0.0
  %1490 = vmatprep.subr.mxu0 0.0
  %1491 = vmatpush1.msra.mxu0 0.0
  %1492 = vmatprep.subr.mxu0 0.0
  %1493 = vmatpush1.msra.mxu0 0.0
  %1494 = vmatprep.subr.mxu0 0.0
  %1495 = vmatpush1.msra.mxu0 0.0
  %1496 = vmatprep.subr.mxu0 0.0
  %1497 = vmatpush1.msra.mxu0 0.0
  %1498 = vmatprep.subr.mxu0 0.0
  %1499 = vmatpush1.msra.mxu0 0.0
  %1500 = vmatprep.subr.mxu0 0.0
  %1501 = vmatpush1.msra.mxu0 0.0
  %1502 = vmatprep.subr.mxu0 0.0
  %1503 = vmatpush1.msra.mxu0 0.0
  %1504 = vmatprep.subr.mxu0 0.0
  %1505 = vmatpush1.msra.mxu0 0.0
  %1506 = vmatprep.subr.mxu0 0.0
  %1507 = vmatpush1.msra.mxu0 0.0
  %1508 = vmatprep.subr.mxu0 0.0
  %1509 = vmatpush1.msra.mxu0 0.0
  %1510 = vmatprep.subr.mxu0 0.0
  %1511 = vmatpush1.msra.mxu0 0.0
  %1512 = vmatprep.mubr.f32.mxu0 0.0
  %1513 = vmatmul.mubr.f32.gmra.mrb[0].mxu0 %v1443
  %v1514 = vpop.f32.mrb[0].mxu0
  %v1515 = vadd.f32 %v1439, %v1514
  %v1516 = vpop.f32.mrb[0].mxu0
  %1517 = vmatprep.mubr.f32.mxu0 0.0
  %1518 = vmatmul.mubr.f32.gmra.mrb[0].mxu0 %v1446
  %v1519 = vpop.f32.mrb[0].mxu0
  %v1520 = vadd.f32 %v1439, %v1519
  %v1521 = vpop.f32.mrb[0].mxu0
  %1522 = vdwg.mxu0
  %v1523 = vadd.f32 %v1330, %v1515
  %v1524 = vadd.f32 %v1331, %v1520
  %v1525 = vld [vmem:[%s12] sm:$0x1]
  %v1526 = vld [vmem:[%s13] sm:$0x1]
  %v1527 = vsel %vm62, %v1523, 0.0
  %1528 = vadd.xlane.f32.xlu0 %v1527
  %v1529 = vpop.xlane.xlu0 %1528
  %v1530 = vsel %vm62, %v1524, 0.0
  %1531 = vadd.xlane.f32.xlu0 %v1530
  %v1532 = vpop.xlane.xlu0 %1531
  %v1533 = vmul.f32 %v1529, %v1295
  %v1534 = vmul.f32 %v1532, %v1295
  %v1535 = vsub.f32 %v1523, %v1533
  %v1536 = vsub.f32 %v1524, %v1534
  %v1537 = vmul.f32 %v1535, %v1535
  %v1538 = vmul.f32 %v1536, %v1536
  %v1539 = vsel %vm62, %v1537, 0.0
  %1540 = vadd.xlane.f32.xlu0 %v1539
  %v1541 = vpop.xlane.xlu0 %1540
  %v1542 = vsel %vm62, %v1538, 0.0
  %1543 = vadd.xlane.f32.xlu0 %v1542
  %v1544 = vpop.xlane.xlu0 %1543
  %v1545 = vmul.f32 %v1541, %v1295
  %v1546 = vmul.f32 %v1544, %v1295
  %v1547 = vadd.f32 %v1545, 1e-05
  %v1548 = vadd.f32 %v1546, 1e-05
  %v1549 = vrsqrt.pop %v1547
  %v1550 = vrsqrt.pop %v1548
  %v1551 = vmul.f32 %v1535, %v1549
  %v1552 = vmul.f32 %v1536, %v1550
  %v1554 = vlaneseq
  %v1555 = vshrl.u32 %v1554, 7
  %v1556 = vsub.s32 0, %v1555
  %v1557 = vrot.slane %v1525, %v1556
  %v1559 = vmul.f32 %v1551, %v1557
  %v1560 = vmul.f32 %v1552, %v1557
  %v1562 = vlaneseq
  %v1563 = vshrl.u32 %v1562, 7
  %v1564 = vsub.s32 0, %v1563
  %v1565 = vrot.slane %v1526, %v1564
  %v1567 = vadd.f32 %v1559, %v1565
  %v1568 = vadd.f32 %v1560, %v1565
  %1569 = vst.msk [vmem:[%s14] sm:$0xff] %vm62, %v1567
  %1570 = vst.msk [vmem:[%s14 + $0x8] sm:$0xff] %vm62, %v1568
  // Predicated region
  $region58: #{encoder_layer_forward.1} parent=0 // pred_check
    _
  $region59: #{encoder_layer_forward.1} parent=0 // pred_check_branch
    %1572 = sbr.rel (0) target = $region61
  $region60: #{encoder_layer_forward.1} parent=0 // pred_region
    _
  $region61: #{encoder_layer_forward.1} parent=0 // pred_fallthru
    _
  // Predicated region
  $region62: #{encoder_layer_forward.1} parent=0 // pred_check
    _
  $region63: #{encoder_layer_forward.1} parent=0 // pred_check_branch
    %1574 = sbr.rel (0) target = $region65
  $region64: #{encoder_layer_forward.1} parent=0 // pred_region
    _
  $region65: #{encoder_layer_forward.1} parent=0 // pred_fallthru
    _

</llo_original>
